<compile_context>
chip_gen: v5e
topology: v5e:2x2
jax: 0.10.0
libtpu: 0.0.40
codegen_flags: <defaults>
</compile_context>

<pallas_src>
import jax
import jax.numpy as jnp
from jax.experimental import pallas as pl
from jax.experimental.pallas import tpu as pltpu


# ---------------------------------------------------------------------------
# Fused Pallas kernel: fc1 (all experts) -> per-expert LN/ReLU
#                      -> block-diagonal fc2 -> sigmoid -> gate combine.
# ---------------------------------------------------------------------------

def make_moe_fused_kernel(E, H, O):
    def kernel(x_ref, gates_ref, w1_ref, b1_ref, g_ref, bt_ref,
               w2bd_ref, b2_ref, y_ref):
        # fc1 for all experts at once: (B, Dp) @ (Dp, E*H) -> (B, E*H)
        h_all = jnp.dot(x_ref[...], w1_ref[...],
                        preferred_element_type=jnp.float32) + b1_ref[...]

        # Per-expert LayerNorm + ReLU on lane-aligned slices (E small; unrolled).
        cols = []
        for e in range(E):
            sl = slice(e * H, (e + 1) * H)                   # lane-aligned (H=256)
            he = h_all[:, sl]                                # (B, H)
            mu = jnp.mean(he, axis=-1, keepdims=True)
            var = jnp.mean(jnp.square(he - mu), axis=-1, keepdims=True)
            he = (he - mu) * jax.lax.rsqrt(var + 1e-5)
            he = he * g_ref[:, sl] + bt_ref[:, sl]
            cols.append(jnp.maximum(he, 0.0))                # ReLU; Dropout=id (eval)
        h_act = jnp.concatenate(cols, axis=-1)               # (B, E*H)

        # fc2 for all experts in ONE block-diagonal MXU pass:
        #   (B, E*H) @ (E*H, E*O) -> (B, E*O)
        z_all = jnp.dot(h_act, w2bd_ref[...],
                        preferred_element_type=jnp.float32) + b2_ref[...]
        o_all = jax.nn.sigmoid(z_all)                        # single EUP pass

        gates = gates_ref[...]                               # (B, E)
        if O == 1:
            # gate-weighted combine == lane reduction over experts
            y = jnp.sum(gates * o_all, axis=-1, keepdims=True)        # (B, 1)
        else:
            y = jnp.zeros((o_all.shape[0], O), jnp.float32)
            for e in range(E):
                y = y + gates[:, e:e + 1] * o_all[:, e * O:(e + 1) * O]
        y_ref[...] = y                                       # single output write
    return kernel


def _full_spec(shape):
    zeros = (0,) * len(shape)
    return pl.BlockSpec(shape, lambda zeros=zeros: zeros)


# ---------------------------------------------------------------------------
# Wrapper: gating (plain JAX) + parameter stacking/padding + fused pallas_call
# ---------------------------------------------------------------------------

def moe_regression_forward(x, params, k):
    B, D = x.shape
    E = params["w_gate"].shape[1]
    H = params["w1"].shape[-1]
    O = params["w2"].shape[-1]

    # ---- gating: softmax(x @ w_gate), top-k renormalization, scatter ----
    probs = jax.nn.softmax(x @ params["w_gate"], axis=1)
    kk = min(k, E)
    top_vals, top_idx = jax.lax.top_k(probs, kk)
    top_gates = top_vals / (jnp.sum(top_vals, axis=1, keepdims=True) + 1e-6)
    gates = jnp.zeros_like(probs).at[jnp.arange(B)[:, None], top_idx].set(top_gates)
    gates = gates.astype(jnp.float32)                        # (B, E)

    # ---- stack experts column-wise, zero-pad D to a lane multiple ----
    Dp = pl.cdiv(D, 128) * 128
    xp = jnp.pad(x.astype(jnp.float32), ((0, 0), (0, Dp - D)))
    w1s = jnp.pad(jnp.transpose(params["w1"], (1, 0, 2)).reshape(D, E * H),
                  ((0, Dp - D), (0, 0)))                     # (Dp, E*H)
    b1s = params["b1"].reshape(1, E * H)
    gms = params["ln_g"].reshape(1, E * H)
    bts = params["ln_b"].reshape(1, E * H)

    # Block-diagonal fc2 weights: w2bd[e*H + h, e*O + o] = w2[e, h, o]
    eye = jnp.eye(E, dtype=jnp.float32)                      # (E, E)
    w2bd = (params["w2"][:, :, None, :] * eye[:, None, :, None]).reshape(E * H, E * O)
    b2s = params["b2"].reshape(1, E * O)

    operands = (xp, gates, w1s, b1s, gms, bts, w2bd, b2s)

    y = pl.pallas_call(
        make_moe_fused_kernel(E, H, O),
        out_shape=jax.ShapeDtypeStruct((B, O), jnp.float32),
        in_specs=[_full_spec(op.shape) for op in operands],
        out_specs=_full_spec((B, O)),
        compiler_params=pltpu.CompilerParams(vmem_limit_bytes=32 * 1024 * 1024),
    )(*operands)

    return y, None  # (y, loss) — target=None path of MoE_regression.forward


# ---------------------------------------------------------------------------
# Deterministic parameter init (synthetic; shapes follow MoE_regression.__init__)
# ---------------------------------------------------------------------------

def init_params(key, D, E, H, O):
    ks = jax.random.split(key, 6)
    return dict(
        w_gate=jax.random.normal(ks[0], (D, E), jnp.float32) * 0.05,
        w_noise=jax.random.normal(ks[1], (D, E), jnp.float32) * 0.05,  # unused (eval)
        w1=jax.random.normal(ks[2], (E, D, H), jnp.float32) * (1.0 / jnp.sqrt(D)),
        b1=jax.random.normal(ks[3], (E, 1, H), jnp.float32) * 0.01,
        ln_g=jnp.ones((E, 1, H), jnp.float32),   # nn.LayerNorm default weight
        ln_b=jnp.zeros((E, 1, H), jnp.float32),  # nn.LayerNorm default bias
        w2=jax.random.normal(ks[4], (E, H, O), jnp.float32) * (1.0 / jnp.sqrt(H)),
        b2=jax.random.normal(ks[5], (E, 1, O), jnp.float32) * 0.01,
    )


# Pure-JAX reference for validation (highest precision matmuls)
def reference_forward(x, params, k):
    B = x.shape[0]
    E = params["w_gate"].shape[1]
    hp = jax.lax.Precision.HIGHEST
    probs = jax.nn.softmax(x @ params["w_gate"], axis=1)
    kk = min(k, E)
    top_vals, top_idx = jax.lax.top_k(probs, kk)
    top_gates = top_vals / (top_vals.sum(1, keepdims=True) + 1e-6)
    gates = jnp.zeros_like(probs).at[jnp.arange(B)[:, None], top_idx].set(top_gates)
    y = 0.0
    for e in range(E):
        h = jnp.dot(x, params["w1"][e], precision=hp) + params["b1"][e]
        mu = h.mean(-1, keepdims=True)
        var = ((h - mu) ** 2).mean(-1, keepdims=True)
        h = (h - mu) / jnp.sqrt(var + 1e-5) * params["ln_g"][e] + params["ln_b"][e]
        h = jnp.maximum(h, 0.0)
        o = jax.nn.sigmoid(jnp.dot(h, params["w2"][e], precision=hp) + params["b2"][e])
        y = y + gates[:, e:e + 1] * o
    return y


if __name__ == "__main__":
    # Small shapes consistent with the module:
    #   transformer_kinds = ["gin"]  -> input_size = 1 * 300
    #   num_experts = 4, hidden_size = 256, output_size = 1, k = 4
    B, D, E, H, O, K = 8, 300, 4, 256, 1, 4

    key = jax.random.PRNGKey(0)
    kx, kp = jax.random.split(key)
    x = jax.random.normal(kx, (B, D), jnp.float32)  # concatenated transformer features
    params = init_params(kp, D, E, H, O)

    y, loss = moe_regression_forward(x, params, K)
    y = jax.block_until_ready(y)

    y_ref = reference_forward(x, params, K)
    assert y.shape == (B, O)
    assert loss is None
    assert jnp.allclose(y, y_ref, atol=1e-3, rtol=1e-3), (y, y_ref)
    print("KERNEL_OK")
</pallas_src>

<mosaic_0001>
module attributes {stable_mosaic.version = 11 : i64} {
  func.func @kernel(%arg0: memref<8x384xf32, #tpu.memory_space<vmem>>, %arg1: memref<8x4xf32, #tpu.memory_space<vmem>>, %arg2: memref<384x1024xf32, #tpu.memory_space<vmem>>, %arg3: memref<1x1024xf32, #tpu.memory_space<vmem>>, %arg4: memref<1x1024xf32, #tpu.memory_space<vmem>>, %arg5: memref<1x1024xf32, #tpu.memory_space<vmem>>, %arg6: memref<1024x4xf32, #tpu.memory_space<vmem>>, %arg7: memref<1x4xf32, #tpu.memory_space<vmem>>, %arg8: memref<8x1xf32, #tpu.memory_space<vmem>>) attributes {dimension_semantics = [], scalar_prefetch = 0 : i64, scratch_operands = 0 : i64, tpu.core_type = #tpu.core_type<tc>} {
    %c0 = arith.constant 0 : index
    %c0_0 = arith.constant 0 : index
    %0 = vector.load %arg0[%c0, %c0_0] : memref<8x384xf32, #tpu.memory_space<vmem>>, vector<8x384xf32>
    %c0_1 = arith.constant 0 : index
    %c0_2 = arith.constant 0 : index
    %1 = vector.load %arg2[%c0_1, %c0_2] : memref<384x1024xf32, #tpu.memory_space<vmem>>, vector<384x1024xf32>
    %cst = arith.constant dense<0.000000e+00> : vector<8x1024xf32>
    %2 = tpu.matmul %0, %1, %cst {dimension_numbers = #tpu.dot_dimension_numbers<[1], [0], [0], [1], [0, 0, 1, 1], [], []>} : vector<8x384xf32>, vector<384x1024xf32>, vector<8x1024xf32> -> vector<8x1024xf32>
    %c0_3 = arith.constant 0 : index
    %c0_4 = arith.constant 0 : index
    %3 = vector.load %arg3[%c0_3, %c0_4] : memref<1x1024xf32, #tpu.memory_space<vmem>>, vector<1x1024xf32>
    %4 = vector.broadcast %3 : vector<1x1024xf32> to vector<8x1024xf32>
    %5 = arith.addf %2, %4 : vector<8x1024xf32>
    %6 = vector.extract_strided_slice %5 {offsets = [0, 0], sizes = [8, 256], strides = [1, 1]} : vector<8x1024xf32> to vector<8x256xf32>
    %cst_5 = arith.constant dense<0.000000e+00> : vector<8xf32>
    %7 = vector.multi_reduction <add>, %6, %cst_5 [1] : vector<8x256xf32> to vector<8xf32>
    %8 = vector.shape_cast %7 : vector<8xf32> to vector<8x1xf32>
    %cst_6 = arith.constant 2.560000e+02 : f32
    %9 = vector.broadcast %cst_6 : f32 to vector<8x1xf32>
    %10 = arith.divf %8, %9 : vector<8x1xf32>
    %11 = vector.broadcast %10 : vector<8x1xf32> to vector<8x256xf32>
    %12 = arith.subf %6, %11 : vector<8x256xf32>
    %13 = arith.mulf %12, %12 : vector<8x256xf32>
    %cst_7 = arith.constant dense<0.000000e+00> : vector<8xf32>
    %14 = vector.multi_reduction <add>, %13, %cst_7 [1] : vector<8x256xf32> to vector<8xf32>
    %15 = vector.shape_cast %14 : vector<8xf32> to vector<8x1xf32>
    %cst_8 = arith.constant 2.560000e+02 : f32
    %16 = vector.broadcast %cst_8 : f32 to vector<8x1xf32>
    %17 = arith.divf %15, %16 : vector<8x1xf32>
    %18 = vector.broadcast %10 : vector<8x1xf32> to vector<8x256xf32>
    %19 = arith.subf %6, %18 : vector<8x256xf32>
    %cst_9 = arith.constant 9.99999974E-6 : f32
    %20 = vector.broadcast %cst_9 : f32 to vector<8x1xf32>
    %21 = arith.addf %17, %20 : vector<8x1xf32>
    %22 = math.rsqrt %21 : vector<8x1xf32>
    %23 = vector.broadcast %22 : vector<8x1xf32> to vector<8x256xf32>
    %24 = arith.mulf %19, %23 : vector<8x256xf32>
    %c0_10 = arith.constant 0 : index
    %c0_11 = arith.constant 0 : index
    %25 = vector.load %arg4[%c0_10, %c0_11] : memref<1x1024xf32, #tpu.memory_space<vmem>>, vector<1x256xf32>
    %26 = vector.broadcast %25 : vector<1x256xf32> to vector<8x256xf32>
    %27 = arith.mulf %24, %26 : vector<8x256xf32>
    %c0_12 = arith.constant 0 : index
    %c0_13 = arith.constant 0 : index
    %28 = vector.load %arg5[%c0_12, %c0_13] : memref<1x1024xf32, #tpu.memory_space<vmem>>, vector<1x256xf32>
    %29 = vector.broadcast %28 : vector<1x256xf32> to vector<8x256xf32>
    %30 = arith.addf %27, %29 : vector<8x256xf32>
    %cst_14 = arith.constant 0.000000e+00 : f32
    %31 = vector.broadcast %cst_14 : f32 to vector<8x256xf32>
    %32 = arith.maximumf %30, %31 : vector<8x256xf32>
    %33 = vector.extract_strided_slice %5 {offsets = [0, 256], sizes = [8, 256], strides = [1, 1]} : vector<8x1024xf32> to vector<8x256xf32>
    %cst_15 = arith.constant dense<0.000000e+00> : vector<8xf32>
    %34 = vector.multi_reduction <add>, %33, %cst_15 [1] : vector<8x256xf32> to vector<8xf32>
    %35 = vector.shape_cast %34 : vector<8xf32> to vector<8x1xf32>
    %cst_16 = arith.constant 2.560000e+02 : f32
    %36 = vector.broadcast %cst_16 : f32 to vector<8x1xf32>
    %37 = arith.divf %35, %36 : vector<8x1xf32>
    %38 = vector.broadcast %37 : vector<8x1xf32> to vector<8x256xf32>
    %39 = arith.subf %33, %38 : vector<8x256xf32>
    %40 = arith.mulf %39, %39 : vector<8x256xf32>
    %cst_17 = arith.constant dense<0.000000e+00> : vector<8xf32>
    %41 = vector.multi_reduction <add>, %40, %cst_17 [1] : vector<8x256xf32> to vector<8xf32>
    %42 = vector.shape_cast %41 : vector<8xf32> to vector<8x1xf32>
    %cst_18 = arith.constant 2.560000e+02 : f32
    %43 = vector.broadcast %cst_18 : f32 to vector<8x1xf32>
    %44 = arith.divf %42, %43 : vector<8x1xf32>
    %45 = vector.broadcast %37 : vector<8x1xf32> to vector<8x256xf32>
    %46 = arith.subf %33, %45 : vector<8x256xf32>
    %cst_19 = arith.constant 9.99999974E-6 : f32
    %47 = vector.broadcast %cst_19 : f32 to vector<8x1xf32>
    %48 = arith.addf %44, %47 : vector<8x1xf32>
    %49 = math.rsqrt %48 : vector<8x1xf32>
    %50 = vector.broadcast %49 : vector<8x1xf32> to vector<8x256xf32>
    %51 = arith.mulf %46, %50 : vector<8x256xf32>
    %c0_20 = arith.constant 0 : index
    %c256 = arith.constant 256 : index
    %52 = vector.load %arg4[%c0_20, %c256] : memref<1x1024xf32, #tpu.memory_space<vmem>>, vector<1x256xf32>
    %53 = vector.broadcast %52 : vector<1x256xf32> to vector<8x256xf32>
    %54 = arith.mulf %51, %53 : vector<8x256xf32>
    %c0_21 = arith.constant 0 : index
    %c256_22 = arith.constant 256 : index
    %55 = vector.load %arg5[%c0_21, %c256_22] : memref<1x1024xf32, #tpu.memory_space<vmem>>, vector<1x256xf32>
    %56 = vector.broadcast %55 : vector<1x256xf32> to vector<8x256xf32>
    %57 = arith.addf %54, %56 : vector<8x256xf32>
    %cst_23 = arith.constant 0.000000e+00 : f32
    %58 = vector.broadcast %cst_23 : f32 to vector<8x256xf32>
    %59 = arith.maximumf %57, %58 : vector<8x256xf32>
    %60 = vector.extract_strided_slice %5 {offsets = [0, 512], sizes = [8, 256], strides = [1, 1]} : vector<8x1024xf32> to vector<8x256xf32>
    %cst_24 = arith.constant dense<0.000000e+00> : vector<8xf32>
    %61 = vector.multi_reduction <add>, %60, %cst_24 [1] : vector<8x256xf32> to vector<8xf32>
    %62 = vector.shape_cast %61 : vector<8xf32> to vector<8x1xf32>
    %cst_25 = arith.constant 2.560000e+02 : f32
    %63 = vector.broadcast %cst_25 : f32 to vector<8x1xf32>
    %64 = arith.divf %62, %63 : vector<8x1xf32>
    %65 = vector.broadcast %64 : vector<8x1xf32> to vector<8x256xf32>
    %66 = arith.subf %60, %65 : vector<8x256xf32>
    %67 = arith.mulf %66, %66 : vector<8x256xf32>
    %cst_26 = arith.constant dense<0.000000e+00> : vector<8xf32>
    %68 = vector.multi_reduction <add>, %67, %cst_26 [1] : vector<8x256xf32> to vector<8xf32>
    %69 = vector.shape_cast %68 : vector<8xf32> to vector<8x1xf32>
    %cst_27 = arith.constant 2.560000e+02 : f32
    %70 = vector.broadcast %cst_27 : f32 to vector<8x1xf32>
    %71 = arith.divf %69, %70 : vector<8x1xf32>
    %72 = vector.broadcast %64 : vector<8x1xf32> to vector<8x256xf32>
    %73 = arith.subf %60, %72 : vector<8x256xf32>
    %cst_28 = arith.constant 9.99999974E-6 : f32
    %74 = vector.broadcast %cst_28 : f32 to vector<8x1xf32>
    %75 = arith.addf %71, %74 : vector<8x1xf32>
    %76 = math.rsqrt %75 : vector<8x1xf32>
    %77 = vector.broadcast %76 : vector<8x1xf32> to vector<8x256xf32>
    %78 = arith.mulf %73, %77 : vector<8x256xf32>
    %c0_29 = arith.constant 0 : index
    %c512 = arith.constant 512 : index
    %79 = vector.load %arg4[%c0_29, %c512] : memref<1x1024xf32, #tpu.memory_space<vmem>>, vector<1x256xf32>
    %80 = vector.broadcast %79 : vector<1x256xf32> to vector<8x256xf32>
    %81 = arith.mulf %78, %80 : vector<8x256xf32>
    %c0_30 = arith.constant 0 : index
    %c512_31 = arith.constant 512 : index
    %82 = vector.load %arg5[%c0_30, %c512_31] : memref<1x1024xf32, #tpu.memory_space<vmem>>, vector<1x256xf32>
    %83 = vector.broadcast %82 : vector<1x256xf32> to vector<8x256xf32>
    %84 = arith.addf %81, %83 : vector<8x256xf32>
    %cst_32 = arith.constant 0.000000e+00 : f32
    %85 = vector.broadcast %cst_32 : f32 to vector<8x256xf32>
    %86 = arith.maximumf %84, %85 : vector<8x256xf32>
    %87 = vector.extract_strided_slice %5 {offsets = [0, 768], sizes = [8, 256], strides = [1, 1]} : vector<8x1024xf32> to vector<8x256xf32>
    %cst_33 = arith.constant dense<0.000000e+00> : vector<8xf32>
    %88 = vector.multi_reduction <add>, %87, %cst_33 [1] : vector<8x256xf32> to vector<8xf32>
    %89 = vector.shape_cast %88 : vector<8xf32> to vector<8x1xf32>
    %cst_34 = arith.constant 2.560000e+02 : f32
    %90 = vector.broadcast %cst_34 : f32 to vector<8x1xf32>
    %91 = arith.divf %89, %90 : vector<8x1xf32>
    %92 = vector.broadcast %91 : vector<8x1xf32> to vector<8x256xf32>
    %93 = arith.subf %87, %92 : vector<8x256xf32>
    %94 = arith.mulf %93, %93 : vector<8x256xf32>
    %cst_35 = arith.constant dense<0.000000e+00> : vector<8xf32>
    %95 = vector.multi_reduction <add>, %94, %cst_35 [1] : vector<8x256xf32> to vector<8xf32>
    %96 = vector.shape_cast %95 : vector<8xf32> to vector<8x1xf32>
    %cst_36 = arith.constant 2.560000e+02 : f32
    %97 = vector.broadcast %cst_36 : f32 to vector<8x1xf32>
    %98 = arith.divf %96, %97 : vector<8x1xf32>
    %99 = vector.broadcast %91 : vector<8x1xf32> to vector<8x256xf32>
    %100 = arith.subf %87, %99 : vector<8x256xf32>
    %cst_37 = arith.constant 9.99999974E-6 : f32
    %101 = vector.broadcast %cst_37 : f32 to vector<8x1xf32>
    %102 = arith.addf %98, %101 : vector<8x1xf32>
    %103 = math.rsqrt %102 : vector<8x1xf32>
    %104 = vector.broadcast %103 : vector<8x1xf32> to vector<8x256xf32>
    %105 = arith.mulf %100, %104 : vector<8x256xf32>
    %c0_38 = arith.constant 0 : index
    %c768 = arith.constant 768 : index
    %106 = vector.load %arg4[%c0_38, %c768] : memref<1x1024xf32, #tpu.memory_space<vmem>>, vector<1x256xf32>
    %107 = vector.broadcast %106 : vector<1x256xf32> to vector<8x256xf32>
    %108 = arith.mulf %105, %107 : vector<8x256xf32>
    %c0_39 = arith.constant 0 : index
    %c768_40 = arith.constant 768 : index
    %109 = vector.load %arg5[%c0_39, %c768_40] : memref<1x1024xf32, #tpu.memory_space<vmem>>, vector<1x256xf32>
    %110 = vector.broadcast %109 : vector<1x256xf32> to vector<8x256xf32>
    %111 = arith.addf %108, %110 : vector<8x256xf32>
    %cst_41 = arith.constant 0.000000e+00 : f32
    %112 = vector.broadcast %cst_41 : f32 to vector<8x256xf32>
    %113 = arith.maximumf %111, %112 : vector<8x256xf32>
    %114 = tpu.concatenate %32, %59, %86, %113 in 1 : vector<8x256xf32>, vector<8x256xf32>, vector<8x256xf32>, vector<8x256xf32> -> vector<8x1024xf32>
    %c0_42 = arith.constant 0 : index
    %c0_43 = arith.constant 0 : index
    %115 = vector.load %arg6[%c0_42, %c0_43] : memref<1024x4xf32, #tpu.memory_space<vmem>>, vector<1024x4xf32>
    %cst_44 = arith.constant dense<0.000000e+00> : vector<8x4xf32>
    %116 = tpu.matmul %114, %115, %cst_44 {dimension_numbers = #tpu.dot_dimension_numbers<[1], [0], [0], [1], [0, 0, 1, 1], [], []>} : vector<8x1024xf32>, vector<1024x4xf32>, vector<8x4xf32> -> vector<8x4xf32>
    %c0_45 = arith.constant 0 : index
    %c0_46 = arith.constant 0 : index
    %117 = vector.load %arg7[%c0_45, %c0_46] : memref<1x4xf32, #tpu.memory_space<vmem>>, vector<1x4xf32>
    %118 = vector.broadcast %117 : vector<1x4xf32> to vector<8x4xf32>
    %119 = arith.addf %116, %118 : vector<8x4xf32>
    %120 = arith.negf %119 : vector<8x4xf32>
    %121 = math.exp %120 : vector<8x4xf32>
    %cst_47 = arith.constant 1.000000e+00 : f32
    %122 = vector.broadcast %cst_47 : f32 to vector<8x4xf32>
    %123 = arith.addf %122, %121 : vector<8x4xf32>
    %124 = arith.divf %122, %123 : vector<8x4xf32>
    %c0_48 = arith.constant 0 : index
    %c0_49 = arith.constant 0 : index
    %125 = vector.load %arg1[%c0_48, %c0_49] : memref<8x4xf32, #tpu.memory_space<vmem>>, vector<8x4xf32>
    %126 = arith.mulf %125, %124 : vector<8x4xf32>
    %cst_50 = arith.constant dense<0.000000e+00> : vector<8xf32>
    %127 = vector.multi_reduction <add>, %126, %cst_50 [1] : vector<8x4xf32> to vector<8xf32>
    %128 = vector.shape_cast %127 : vector<8xf32> to vector<8x1xf32>
    %c0_51 = arith.constant 0 : index
    %c0_52 = arith.constant 0 : index
    %129 = vector.load %arg8[%c0_51, %c0_52] : memref<8x1xf32, #tpu.memory_space<vmem>>, vector<8x1xf32>
    tpu.vector_store %arg8[%c0_51, %c0_52], %128 {strides = array<i32>} : memref<8x1xf32, #tpu.memory_space<vmem>>, vector<8x1xf32>,
    return
  }
}

</mosaic_0001>

<llo_original>
// kernel: tpu_custom_call.1
$region0: #{tpu_custom_call.1}
  #allocation0 [shape = 'u32[]', space=smem, size = 0x4, offset = 0x4, fixed_abs, tag = 'smem constant byte address 0x4 - core index']
  #allocation1 [shape = 'u32[72,128]{1,0:T(1,128)}', space=vmem, size = 0x9000, scoped, tag = 'internal scratch']
  %s0 = inlined_call_operand.hbm [shape: f32[8,384], index: 0, kind: input, shape index: {}]
  %s1 = inlined_call_operand.vmem [shape: f32[8,4], index: 1, kind: input, shape index: {}]
  %s2 = inlined_call_operand.hbm [shape: f32[384,1024], index: 2, kind: input, shape index: {}]
  %s3 = inlined_call_operand.hbm [shape: f32[1,1024], index: 3, kind: input, shape index: {}]
  %s4 = inlined_call_operand.hbm [shape: f32[1,1024], index: 4, kind: input, shape index: {}]
  %s5 = inlined_call_operand.hbm [shape: f32[1,1024], index: 5, kind: input, shape index: {}]
  %s6 = inlined_call_operand.vmem [shape: f32[1024,4], index: 6, kind: input, shape index: {}]
  %s7 = inlined_call_operand.hbm [shape: f32[1,4], index: 7, kind: input, shape index: {}]
  %s8 = inlined_call_operand.vmem [shape: f32[8,1], index: 8, kind: output, shape index: {}]
  %s9 = sld [smem:[#allocation0]]
  $region66: #{tpu_custom_call.1} parent=0
    _
  %s11 = ssub.s32 1, %s9
  %s12 = scalar_select 0, %s11, %s9
  $region1: #{tpu_custom_call.1} parent=0
    #allocation2 [shape = 'u8[12288]{0}', space=vmem, size = 0x3000, scoped, tag = 'input window, operand 0, single buffered']
    #allocation3 [shape = 's32[1]{0}', space=sflag, size = 0x4, scoped, tag = 'scoped memory for tpu_custom_call.1']
    #allocation4 [shape = 'u8[1572864]{0}', space=vmem, size = 0x180000, scoped, tag = 'input window, operand 2, single buffered']
    #allocation5 [shape = 's32[1]{0}', space=sflag, size = 0x4, scoped, tag = 'scoped memory for tpu_custom_call.1']
    #allocation6 [shape = 'u8[4096]{0}', space=vmem, size = 0x1000, scoped, tag = 'input window, operand 3, single buffered']
    #allocation7 [shape = 'u8[4096]{0}', space=vmem, size = 0x1000, scoped, tag = 'input window, operand 4, single buffered']
    #allocation8 [shape = 's32[1]{0}', space=sflag, size = 0x4, scoped, tag = 'scoped memory for tpu_custom_call.1']
    #allocation9 [shape = 'u8[4096]{0}', space=vmem, size = 0x1000, scoped, tag = 'input window, operand 5, single buffered']
    #allocation10 [shape = 'u8[512]{0}', space=vmem, size = 0x400, scoped, tag = 'input window, operand 7, single buffered']
    #allocation11 [shape = 's32[1]{0}', space=sflag, size = 0x4, scoped, tag = 'scoped memory for tpu_custom_call.1']
    %13 = vsyncpa [#allocation3], 0
    %14 = vsyncpa [#allocation5], 0
    %15 = vsyncpa [#allocation8], 0
    %16 = vsyncpa [#allocation11], 0
    // Predicated region
    $region2: #{tpu_custom_call.1} parent=1 // pred_check
      _
    $region3: #{tpu_custom_call.1} parent=1 // pred_check_branch
      %18 = sbr.rel (0) target = $region5
    $region4: #{tpu_custom_call.1} parent=1 // pred_region
      %20 = vsyncadd [#allocation3], 0
      %s22 = sshll.u32 %s0, 4
      %s23 = int_to_ptr.hbm [resolvable:$true] %s22
      %s24 = sshll.u32 [#allocation2], 4
      %s25 = int_to_ptr.vmem [resolvable:$true] %s24
      %27 = dma.hbm_to_vmem [thread:$0]  %s23, 384, %s25, [#allocation3]
    $region5: #{tpu_custom_call.1} parent=1 // pred_fallthru
      _
    // Predicated region
    $region6: #{tpu_custom_call.1} parent=1 // pred_check
      _
    $region7: #{tpu_custom_call.1} parent=1 // pred_check_branch
      %29 = sbr.rel (0) target = $region9
    $region8: #{tpu_custom_call.1} parent=1 // pred_region
      _
    $region9: #{tpu_custom_call.1} parent=1 // pred_fallthru
      _
    // Predicated region
    $region10: #{tpu_custom_call.1} parent=1 // pred_check
      _
    $region11: #{tpu_custom_call.1} parent=1 // pred_check_branch
      %31 = sbr.rel (0) target = $region13
    $region12: #{tpu_custom_call.1} parent=1 // pred_region
      %33 = vsyncadd [#allocation5], 0
      %s34 = sshll.u32 %s2, 4
      %s35 = int_to_ptr.hbm [resolvable:$true] %s34
      %s36 = sshll.u32 [#allocation4], 4
      %s37 = int_to_ptr.vmem [resolvable:$true] %s36
      %42 = dma.hbm_to_vmem [thread:$0]  %s35, 49152, %s37, [#allocation5], 1024, 1024, 64
    $region13: #{tpu_custom_call.1} parent=1 // pred_fallthru
      _
    // Predicated region
    $region14: #{tpu_custom_call.1} parent=1 // pred_check
      _
    $region15: #{tpu_custom_call.1} parent=1 // pred_check_branch
      %44 = sbr.rel (0) target = $region17
    $region16: #{tpu_custom_call.1} parent=1 // pred_region
      %46 = vsyncadd [#allocation5], 0
      %s48 = sshll.u32 %s3, 4
      %s49 = int_to_ptr.hbm [resolvable:$true] %s48
      %s50 = sshll.u32 [#allocation6], 4
      %s51 = int_to_ptr.vmem [resolvable:$true] %s50
      %53 = dma.hbm_to_vmem [thread:$0]  %s49, 128, %s51, [#allocation5]
    $region17: #{tpu_custom_call.1} parent=1 // pred_fallthru
      _
    // Predicated region
    $region18: #{tpu_custom_call.1} parent=1 // pred_check
      _
    $region19: #{tpu_custom_call.1} parent=1 // pred_check_branch
      %55 = sbr.rel (0) target = $region21
    $region20: #{tpu_custom_call.1} parent=1 // pred_region
      %57 = vsyncadd [#allocation8], 0
      %s59 = sshll.u32 %s4, 4
      %s60 = int_to_ptr.hbm [resolvable:$true] %s59
      %s61 = sshll.u32 [#allocation7], 4
      %s62 = int_to_ptr.vmem [resolvable:$true] %s61
      %64 = dma.hbm_to_vmem [thread:$0]  %s60, 128, %s62, [#allocation8]
    $region21: #{tpu_custom_call.1} parent=1 // pred_fallthru
      _
    // Predicated region
    $region22: #{tpu_custom_call.1} parent=1 // pred_check
      _
    $region23: #{tpu_custom_call.1} parent=1 // pred_check_branch
      %66 = sbr.rel (0) target = $region25
    $region24: #{tpu_custom_call.1} parent=1 // pred_region
      %68 = vsyncadd [#allocation8], 0
      %s70 = sshll.u32 %s5, 4
      %s71 = int_to_ptr.hbm [resolvable:$true] %s70
      %s72 = sshll.u32 [#allocation9], 4
      %s73 = int_to_ptr.vmem [resolvable:$true] %s72
      %75 = dma.hbm_to_vmem [thread:$0]  %s71, 128, %s73, [#allocation8]
    $region25: #{tpu_custom_call.1} parent=1 // pred_fallthru
      _
    // Predicated region
    $region26: #{tpu_custom_call.1} parent=1 // pred_check
      _
    $region27: #{tpu_custom_call.1} parent=1 // pred_check_branch
      %77 = sbr.rel (0) target = $region29
    $region28: #{tpu_custom_call.1} parent=1 // pred_region
      _
    $region29: #{tpu_custom_call.1} parent=1 // pred_fallthru
      _
    // Predicated region
    $region30: #{tpu_custom_call.1} parent=1 // pred_check
      _
    $region31: #{tpu_custom_call.1} parent=1 // pred_check_branch
      %79 = sbr.rel (0) target = $region33
    $region32: #{tpu_custom_call.1} parent=1 // pred_region
      %81 = vsyncadd [#allocation11], 0
      %s83 = sshll.u32 %s7, 4
      %s84 = int_to_ptr.hbm [resolvable:$true] %s83
      %s85 = sshll.u32 [#allocation10], 4
      %s86 = int_to_ptr.vmem [resolvable:$true] %s85
      %88 = dma.hbm_to_vmem [thread:$0]  %s84, 16, %s86, [#allocation11]
    $region33: #{tpu_custom_call.1} parent=1 // pred_fallthru
      _
    // Predicated region
    $region34: #{tpu_custom_call.1} parent=1 // pred_check
      _
    $region35: #{tpu_custom_call.1} parent=1 // pred_check_branch
      %90 = sbr.rel (0) target = $region37
    $region36: #{tpu_custom_call.1} parent=1 // pred_region
      %92 = dma.done [#allocation3], 384
    $region37: #{tpu_custom_call.1} parent=1 // pred_fallthru
      _
    // Predicated region
    $region38: #{tpu_custom_call.1} parent=1 // pred_check
      _
    $region39: #{tpu_custom_call.1} parent=1 // pred_check_branch
      %94 = sbr.rel (0) target = $region41
    $region40: #{tpu_custom_call.1} parent=1 // pred_region
      %96 = dma.done [#allocation5], 49152
    $region41: #{tpu_custom_call.1} parent=1 // pred_fallthru
      _
    // Predicated region
    $region42: #{tpu_custom_call.1} parent=1 // pred_check
      _
    $region43: #{tpu_custom_call.1} parent=1 // pred_check_branch
      %98 = sbr.rel (0) target = $region45
    $region44: #{tpu_custom_call.1} parent=1 // pred_region
      %100 = dma.done [#allocation5], 128
    $region45: #{tpu_custom_call.1} parent=1 // pred_fallthru
      _
    // Predicated region
    $region46: #{tpu_custom_call.1} parent=1 // pred_check
      _
    $region47: #{tpu_custom_call.1} parent=1 // pred_check_branch
      %102 = sbr.rel (0) target = $region49
    $region48: #{tpu_custom_call.1} parent=1 // pred_region
      %104 = dma.done [#allocation8], 128
    $region49: #{tpu_custom_call.1} parent=1 // pred_fallthru
      _
    // Predicated region
    $region50: #{tpu_custom_call.1} parent=1 // pred_check
      _
    $region51: #{tpu_custom_call.1} parent=1 // pred_check_branch
      %106 = sbr.rel (0) target = $region53
    $region52: #{tpu_custom_call.1} parent=1 // pred_region
      %108 = dma.done [#allocation8], 128
    $region53: #{tpu_custom_call.1} parent=1 // pred_fallthru
      _
    // Predicated region
    $region54: #{tpu_custom_call.1} parent=1 // pred_check
      _
    $region55: #{tpu_custom_call.1} parent=1 // pred_check_branch
      %110 = sbr.rel (0) target = $region57
    $region56: #{tpu_custom_call.1} parent=1 // pred_region
      %112 = dma.done [#allocation11], 16
    $region57: #{tpu_custom_call.1} parent=1 // pred_fallthru
      _
    %v113 = vld [vmem:[#allocation2] sm:$0xff]
    %v114 = vld [vmem:[#allocation2 + $0x8] sm:$0xff]
    %v115 = vld [vmem:[#allocation2 + $0x10] sm:$0xff]
    %v116 = vld [vmem:[#allocation4] sm:$0xff]
    %v117 = vld [vmem:[#allocation4 + $0x8] sm:$0xff]
    %v118 = vld [vmem:[#allocation4 + $0x10] sm:$0xff]
    %v119 = vld [vmem:[#allocation4 + $0x18] sm:$0xff]
    %v120 = vld [vmem:[#allocation4 + $0x20] sm:$0xff]
    %v121 = vld [vmem:[#allocation4 + $0x28] sm:$0xff]
    %v122 = vld [vmem:[#allocation4 + $0x30] sm:$0xff]
    %v123 = vld [vmem:[#allocation4 + $0x38] sm:$0xff]
    %v124 = vld [vmem:[#allocation4 + $0x40] sm:$0xff]
    %v125 = vld [vmem:[#allocation4 + $0x48] sm:$0xff]
    %v126 = vld [vmem:[#allocation4 + $0x50] sm:$0xff]
    %v127 = vld [vmem:[#allocation4 + $0x58] sm:$0xff]
    %v128 = vld [vmem:[#allocation4 + $0x60] sm:$0xff]
    %v129 = vld [vmem:[#allocation4 + $0x68] sm:$0xff]
    %v130 = vld [vmem:[#allocation4 + $0x70] sm:$0xff]
    %v131 = vld [vmem:[#allocation4 + $0x78] sm:$0xff]
    %v132 = vld [vmem:[#allocation4 + $0x80] sm:$0xff]
    %v133 = vld [vmem:[#allocation4 + $0x88] sm:$0xff]
    %v134 = vld [vmem:[#allocation4 + $0x90] sm:$0xff]
    %v135 = vld [vmem:[#allocation4 + $0x98] sm:$0xff]
    %v136 = vld [vmem:[#allocation4 + $0xa0] sm:$0xff]
    %v137 = vld [vmem:[#allocation4 + $0xa8] sm:$0xff]
    %v138 = vld [vmem:[#allocation4 + $0xb0] sm:$0xff]
    %v139 = vld [vmem:[#allocation4 + $0xb8] sm:$0xff]
    %v140 = vld [vmem:[#allocation4 + $0xc0] sm:$0xff]
    %v141 = vld [vmem:[#allocation4 + $0xc8] sm:$0xff]
    %v142 = vld [vmem:[#allocation4 + $0xd0] sm:$0xff]
    %v143 = vld [vmem:[#allocation4 + $0xd8] sm:$0xff]
    %v144 = vld [vmem:[#allocation4 + $0xe0] sm:$0xff]
    %v145 = vld [vmem:[#allocation4 + $0xe8] sm:$0xff]
    %v146 = vld [vmem:[#allocation4 + $0xf0] sm:$0xff]
    %v147 = vld [vmem:[#allocation4 + $0xf8] sm:$0xff]
    %v148 = vld [vmem:[#allocation4 + $0x100] sm:$0xff]
    %v149 = vld [vmem:[#allocation4 + $0x108] sm:$0xff]
    %v150 = vld [vmem:[#allocation4 + $0x110] sm:$0xff]
    %v151 = vld [vmem:[#allocation4 + $0x118] sm:$0xff]
    %v152 = vld [vmem:[#allocation4 + $0x120] sm:$0xff]
    %v153 = vld [vmem:[#allocation4 + $0x128] sm:$0xff]
    %v154 = vld [vmem:[#allocation4 + $0x130] sm:$0xff]
    %v155 = vld [vmem:[#allocation4 + $0x138] sm:$0xff]
    %v156 = vld [vmem:[#allocation4 + $0x140] sm:$0xff]
    %v157 = vld [vmem:[#allocation4 + $0x148] sm:$0xff]
    %v158 = vld [vmem:[#allocation4 + $0x150] sm:$0xff]
    %v159 = vld [vmem:[#allocation4 + $0x158] sm:$0xff]
    %v160 = vld [vmem:[#allocation4 + $0x160] sm:$0xff]
    %v161 = vld [vmem:[#allocation4 + $0x168] sm:$0xff]
    %v162 = vld [vmem:[#allocation4 + $0x170] sm:$0xff]
    %v163 = vld [vmem:[#allocation4 + $0x178] sm:$0xff]
    %v164 = vld [vmem:[#allocation4 + $0x180] sm:$0xff]
    %v165 = vld [vmem:[#allocation4 + $0x188] sm:$0xff]
    %v166 = vld [vmem:[#allocation4 + $0x190] sm:$0xff]
    %v167 = vld [vmem:[#allocation4 + $0x198] sm:$0xff]
    %v168 = vld [vmem:[#allocation4 + $0x1a0] sm:$0xff]
    %v169 = vld [vmem:[#allocation4 + $0x1a8] sm:$0xff]
    %v170 = vld [vmem:[#allocation4 + $0x1b0] sm:$0xff]
    %v171 = vld [vmem:[#allocation4 + $0x1b8] sm:$0xff]
    %v172 = vld [vmem:[#allocation4 + $0x1c0] sm:$0xff]
    %v173 = vld [vmem:[#allocation4 + $0x1c8] sm:$0xff]
    %v174 = vld [vmem:[#allocation4 + $0x1d0] sm:$0xff]
    %v175 = vld [vmem:[#allocation4 + $0x1d8] sm:$0xff]
    %v176 = vld [vmem:[#allocation4 + $0x1e0] sm:$0xff]
    %v177 = vld [vmem:[#allocation4 + $0x1e8] sm:$0xff]
    %v178 = vld [vmem:[#allocation4 + $0x1f0] sm:$0xff]
    %v179 = vld [vmem:[#allocation4 + $0x1f8] sm:$0xff]
    %v180 = vld [vmem:[#allocation4 + $0x200] sm:$0xff]
    %v181 = vld [vmem:[#allocation4 + $0x208] sm:$0xff]
    %v182 = vld [vmem:[#allocation4 + $0x210] sm:$0xff]
    %v183 = vld [vmem:[#allocation4 + $0x218] sm:$0xff]
    %v184 = vld [vmem:[#allocation4 + $0x220] sm:$0xff]
    %v185 = vld [vmem:[#allocation4 + $0x228] sm:$0xff]
    %v186 = vld [vmem:[#allocation4 + $0x230] sm:$0xff]
    %v187 = vld [vmem:[#allocation4 + $0x238] sm:$0xff]
    %v188 = vld [vmem:[#allocation4 + $0x240] sm:$0xff]
    %v189 = vld [vmem:[#allocation4 + $0x248] sm:$0xff]
    %v190 = vld [vmem:[#allocation4 + $0x250] sm:$0xff]
    %v191 = vld [vmem:[#allocation4 + $0x258] sm:$0xff]
    %v192 = vld [vmem:[#allocation4 + $0x260] sm:$0xff]
    %v193 = vld [vmem:[#allocation4 + $0x268] sm:$0xff]
    %v194 = vld [vmem:[#allocation4 + $0x270] sm:$0xff]
    %v195 = vld [vmem:[#allocation4 + $0x278] sm:$0xff]
    %v196 = vld [vmem:[#allocation4 + $0x280] sm:$0xff]
    %v197 = vld [vmem:[#allocation4 + $0x288] sm:$0xff]
    %v198 = vld [vmem:[#allocation4 + $0x290] sm:$0xff]
    %v199 = vld [vmem:[#allocation4 + $0x298] sm:$0xff]
    %v200 = vld [vmem:[#allocation4 + $0x2a0] sm:$0xff]
    %v201 = vld [vmem:[#allocation4 + $0x2a8] sm:$0xff]
    %v202 = vld [vmem:[#allocation4 + $0x2b0] sm:$0xff]
    %v203 = vld [vmem:[#allocation4 + $0x2b8] sm:$0xff]
    %v204 = vld [vmem:[#allocation4 + $0x2c0] sm:$0xff]
    %v205 = vld [vmem:[#allocation4 + $0x2c8] sm:$0xff]
    %v206 = vld [vmem:[#allocation4 + $0x2d0] sm:$0xff]
    %v207 = vld [vmem:[#allocation4 + $0x2d8] sm:$0xff]
    %v208 = vld [vmem:[#allocation4 + $0x2e0] sm:$0xff]
    %v209 = vld [vmem:[#allocation4 + $0x2e8] sm:$0xff]
    %v210 = vld [vmem:[#allocation4 + $0x2f0] sm:$0xff]
    %v211 = vld [vmem:[#allocation4 + $0x2f8] sm:$0xff]
    %v212 = vld [vmem:[#allocation4 + $0x300] sm:$0xff]
    %v213 = vld [vmem:[#allocation4 + $0x308] sm:$0xff]
    %v214 = vld [vmem:[#allocation4 + $0x310] sm:$0xff]
    %v215 = vld [vmem:[#allocation4 + $0x318] sm:$0xff]
    %v216 = vld [vmem:[#allocation4 + $0x320] sm:$0xff]
    %v217 = vld [vmem:[#allocation4 + $0x328] sm:$0xff]
    %v218 = vld [vmem:[#allocation4 + $0x330] sm:$0xff]
    %v219 = vld [vmem:[#allocation4 + $0x338] sm:$0xff]
    %v220 = vld [vmem:[#allocation4 + $0x340] sm:$0xff]
    %v221 = vld [vmem:[#allocation4 + $0x348] sm:$0xff]
    %v222 = vld [vmem:[#allocation4 + $0x350] sm:$0xff]
    %v223 = vld [vmem:[#allocation4 + $0x358] sm:$0xff]
    %v224 = vld [vmem:[#allocation4 + $0x360] sm:$0xff]
    %v225 = vld [vmem:[#allocation4 + $0x368] sm:$0xff]
    %v226 = vld [vmem:[#allocation4 + $0x370] sm:$0xff]
    %v227 = vld [vmem:[#allocation4 + $0x378] sm:$0xff]
    %v228 = vld [vmem:[#allocation4 + $0x380] sm:$0xff]
    %v229 = vld [vmem:[#allocation4 + $0x388] sm:$0xff]
    %v230 = vld [vmem:[#allocation4 + $0x390] sm:$0xff]
    %v231 = vld [vmem:[#allocation4 + $0x398] sm:$0xff]
    %v232 = vld [vmem:[#allocation4 + $0x3a0] sm:$0xff]
    %v233 = vld [vmem:[#allocation4 + $0x3a8] sm:$0xff]
    %v234 = vld [vmem:[#allocation4 + $0x3b0] sm:$0xff]
    %v235 = vld [vmem:[#allocation4 + $0x3b8] sm:$0xff]
    %v236 = vld [vmem:[#allocation4 + $0x3c0] sm:$0xff]
    %v237 = vld [vmem:[#allocation4 + $0x3c8] sm:$0xff]
    %v238 = vld [vmem:[#allocation4 + $0x3d0] sm:$0xff]
    %v239 = vld [vmem:[#allocation4 + $0x3d8] sm:$0xff]
    %v240 = vld [vmem:[#allocation4 + $0x3e0] sm:$0xff]
    %v241 = vld [vmem:[#allocation4 + $0x3e8] sm:$0xff]
    %v242 = vld [vmem:[#allocation4 + $0x3f0] sm:$0xff]
    %v243 = vld [vmem:[#allocation4 + $0x3f8] sm:$0xff]
    %v244 = vld [vmem:[#allocation4 + $0x400] sm:$0xff]
    %v245 = vld [vmem:[#allocation4 + $0x408] sm:$0xff]
    %v246 = vld [vmem:[#allocation4 + $0x410] sm:$0xff]
    %v247 = vld [vmem:[#allocation4 + $0x418] sm:$0xff]
    %v248 = vld [vmem:[#allocation4 + $0x420] sm:$0xff]
    %v249 = vld [vmem:[#allocation4 + $0x428] sm:$0xff]
    %v250 = vld [vmem:[#allocation4 + $0x430] sm:$0xff]
    %v251 = vld [vmem:[#allocation4 + $0x438] sm:$0xff]
    %v252 = vld [vmem:[#allocation4 + $0x440] sm:$0xff]
    %v253 = vld [vmem:[#allocation4 + $0x448] sm:$0xff]
    %v254 = vld [vmem:[#allocation4 + $0x450] sm:$0xff]
    %v255 = vld [vmem:[#allocation4 + $0x458] sm:$0xff]
    %v256 = vld [vmem:[#allocation4 + $0x460] sm:$0xff]
    %v257 = vld [vmem:[#allocation4 + $0x468] sm:$0xff]
    %v258 = vld [vmem:[#allocation4 + $0x470] sm:$0xff]
    %v259 = vld [vmem:[#allocation4 + $0x478] sm:$0xff]
    %v260 = vld [vmem:[#allocation4 + $0x480] sm:$0xff]
    %v261 = vld [vmem:[#allocation4 + $0x488] sm:$0xff]
    %v262 = vld [vmem:[#allocation4 + $0x490] sm:$0xff]
    %v263 = vld [vmem:[#allocation4 + $0x498] sm:$0xff]
    %v264 = vld [vmem:[#allocation4 + $0x4a0] sm:$0xff]
    %v265 = vld [vmem:[#allocation4 + $0x4a8] sm:$0xff]
    %v266 = vld [vmem:[#allocation4 + $0x4b0] sm:$0xff]
    %v267 = vld [vmem:[#allocation4 + $0x4b8] sm:$0xff]
    %v268 = vld [vmem:[#allocation4 + $0x4c0] sm:$0xff]
    %v269 = vld [vmem:[#allocation4 + $0x4c8] sm:$0xff]
    %v270 = vld [vmem:[#allocation4 + $0x4d0] sm:$0xff]
    %v271 = vld [vmem:[#allocation4 + $0x4d8] sm:$0xff]
    %v272 = vld [vmem:[#allocation4 + $0x4e0] sm:$0xff]
    %v273 = vld [vmem:[#allocation4 + $0x4e8] sm:$0xff]
    %v274 = vld [vmem:[#allocation4 + $0x4f0] sm:$0xff]
    %v275 = vld [vmem:[#allocation4 + $0x4f8] sm:$0xff]
    %v276 = vld [vmem:[#allocation4 + $0x500] sm:$0xff]
    %v277 = vld [vmem:[#allocation4 + $0x508] sm:$0xff]
    %v278 = vld [vmem:[#allocation4 + $0x510] sm:$0xff]
    %v279 = vld [vmem:[#allocation4 + $0x518] sm:$0xff]
    %v280 = vld [vmem:[#allocation4 + $0x520] sm:$0xff]
    %v281 = vld [vmem:[#allocation4 + $0x528] sm:$0xff]
    %v282 = vld [vmem:[#allocation4 + $0x530] sm:$0xff]
    %v283 = vld [vmem:[#allocation4 + $0x538] sm:$0xff]
    %v284 = vld [vmem:[#allocation4 + $0x540] sm:$0xff]
    %v285 = vld [vmem:[#allocation4 + $0x548] sm:$0xff]
    %v286 = vld [vmem:[#allocation4 + $0x550] sm:$0xff]
    %v287 = vld [vmem:[#allocation4 + $0x558] sm:$0xff]
    %v288 = vld [vmem:[#allocation4 + $0x560] sm:$0xff]
    %v289 = vld [vmem:[#allocation4 + $0x568] sm:$0xff]
    %v290 = vld [vmem:[#allocation4 + $0x570] sm:$0xff]
    %v291 = vld [vmem:[#allocation4 + $0x578] sm:$0xff]
    %v292 = vld [vmem:[#allocation4 + $0x580] sm:$0xff]
    %v293 = vld [vmem:[#allocation4 + $0x588] sm:$0xff]
    %v294 = vld [vmem:[#allocation4 + $0x590] sm:$0xff]
    %v295 = vld [vmem:[#allocation4 + $0x598] sm:$0xff]
    %v296 = vld [vmem:[#allocation4 + $0x5a0] sm:$0xff]
    %v297 = vld [vmem:[#allocation4 + $0x5a8] sm:$0xff]
    %v298 = vld [vmem:[#allocation4 + $0x5b0] sm:$0xff]
    %v299 = vld [vmem:[#allocation4 + $0x5b8] sm:$0xff]
    %v300 = vld [vmem:[#allocation4 + $0x5c0] sm:$0xff]
    %v301 = vld [vmem:[#allocation4 + $0x5c8] sm:$0xff]
    %v302 = vld [vmem:[#allocation4 + $0x5d0] sm:$0xff]
    %v303 = vld [vmem:[#allocation4 + $0x5d8] sm:$0xff]
    %v304 = vld [vmem:[#allocation4 + $0x5e0] sm:$0xff]
    %v305 = vld [vmem:[#allocation4 + $0x5e8] sm:$0xff]
    %v306 = vld [vmem:[#allocation4 + $0x5f0] sm:$0xff]
    %v307 = vld [vmem:[#allocation4 + $0x5f8] sm:$0xff]
    %v308 = vld [vmem:[#allocation4 + $0x600] sm:$0xff]
    %v309 = vld [vmem:[#allocation4 + $0x608] sm:$0xff]
    %v310 = vld [vmem:[#allocation4 + $0x610] sm:$0xff]
    %v311 = vld [vmem:[#allocation4 + $0x618] sm:$0xff]
    %v312 = vld [vmem:[#allocation4 + $0x620] sm:$0xff]
    %v313 = vld [vmem:[#allocation4 + $0x628] sm:$0xff]
    %v314 = vld [vmem:[#allocation4 + $0x630] sm:$0xff]
    %v315 = vld [vmem:[#allocation4 + $0x638] sm:$0xff]
    %v316 = vld [vmem:[#allocation4 + $0x640] sm:$0xff]
    %v317 = vld [vmem:[#allocation4 + $0x648] sm:$0xff]
    %v318 = vld [vmem:[#allocation4 + $0x650] sm:$0xff]
    %v319 = vld [vmem:[#allocation4 + $0x658] sm:$0xff]
    %v320 = vld [vmem:[#allocation4 + $0x660] sm:$0xff]
    %v321 = vld [vmem:[#allocation4 + $0x668] sm:$0xff]
    %v322 = vld [vmem:[#allocation4 + $0x670] sm:$0xff]
    %v323 = vld [vmem:[#allocation4 + $0x678] sm:$0xff]
    %v324 = vld [vmem:[#allocation4 + $0x680] sm:$0xff]
    %v325 = vld [vmem:[#allocation4 + $0x688] sm:$0xff]
    %v326 = vld [vmem:[#allocation4 + $0x690] sm:$0xff]
    %v327 = vld [vmem:[#allocation4 + $0x698] sm:$0xff]
    %v328 = vld [vmem:[#allocation4 + $0x6a0] sm:$0xff]
    %v329 = vld [vmem:[#allocation4 + $0x6a8] sm:$0xff]
    %v330 = vld [vmem:[#allocation4 + $0x6b0] sm:$0xff]
    %v331 = vld [vmem:[#allocation4 + $0x6b8] sm:$0xff]
    %v332 = vld [vmem:[#allocation4 + $0x6c0] sm:$0xff]
    %v333 = vld [vmem:[#allocation4 + $0x6c8] sm:$0xff]
    %v334 = vld [vmem:[#allocation4 + $0x6d0] sm:$0xff]
    %v335 = vld [vmem:[#allocation4 + $0x6d8] sm:$0xff]
    %v336 = vld [vmem:[#allocation4 + $0x6e0] sm:$0xff]
    %v337 = vld [vmem:[#allocation4 + $0x6e8] sm:$0xff]
    %v338 = vld [vmem:[#allocation4 + $0x6f0] sm:$0xff]
    %v339 = vld [vmem:[#allocation4 + $0x6f8] sm:$0xff]
    %v340 = vld [vmem:[#allocation4 + $0x700] sm:$0xff]
    %v341 = vld [vmem:[#allocation4 + $0x708] sm:$0xff]
    %v342 = vld [vmem:[#allocation4 + $0x710] sm:$0xff]
    %v343 = vld [vmem:[#allocation4 + $0x718] sm:$0xff]
    %v344 = vld [vmem:[#allocation4 + $0x720] sm:$0xff]
    %v345 = vld [vmem:[#allocation4 + $0x728] sm:$0xff]
    %v346 = vld [vmem:[#allocation4 + $0x730] sm:$0xff]
    %v347 = vld [vmem:[#allocation4 + $0x738] sm:$0xff]
    %v348 = vld [vmem:[#allocation4 + $0x740] sm:$0xff]
    %v349 = vld [vmem:[#allocation4 + $0x748] sm:$0xff]
    %v350 = vld [vmem:[#allocation4 + $0x750] sm:$0xff]
    %v351 = vld [vmem:[#allocation4 + $0x758] sm:$0xff]
    %v352 = vld [vmem:[#allocation4 + $0x760] sm:$0xff]
    %v353 = vld [vmem:[#allocation4 + $0x768] sm:$0xff]
    %v354 = vld [vmem:[#allocation4 + $0x770] sm:$0xff]
    %v355 = vld [vmem:[#allocation4 + $0x778] sm:$0xff]
    %v356 = vld [vmem:[#allocation4 + $0x780] sm:$0xff]
    %v357 = vld [vmem:[#allocation4 + $0x788] sm:$0xff]
    %v358 = vld [vmem:[#allocation4 + $0x790] sm:$0xff]
    %v359 = vld [vmem:[#allocation4 + $0x798] sm:$0xff]
    %v360 = vld [vmem:[#allocation4 + $0x7a0] sm:$0xff]
    %v361 = vld [vmem:[#allocation4 + $0x7a8] sm:$0xff]
    %v362 = vld [vmem:[#allocation4 + $0x7b0] sm:$0xff]
    %v363 = vld [vmem:[#allocation4 + $0x7b8] sm:$0xff]
    %v364 = vld [vmem:[#allocation4 + $0x7c0] sm:$0xff]
    %v365 = vld [vmem:[#allocation4 + $0x7c8] sm:$0xff]
    %v366 = vld [vmem:[#allocation4 + $0x7d0] sm:$0xff]
    %v367 = vld [vmem:[#allocation4 + $0x7d8] sm:$0xff]
    %v368 = vld [vmem:[#allocation4 + $0x7e0] sm:$0xff]
    %v369 = vld [vmem:[#allocation4 + $0x7e8] sm:$0xff]
    %v370 = vld [vmem:[#allocation4 + $0x7f0] sm:$0xff]
    %v371 = vld [vmem:[#allocation4 + $0x7f8] sm:$0xff]
    %v372 = vld [vmem:[#allocation4 + $0x800] sm:$0xff]
    %v373 = vld [vmem:[#allocation4 + $0x808] sm:$0xff]
    %v374 = vld [vmem:[#allocation4 + $0x810] sm:$0xff]
    %v375 = vld [vmem:[#allocation4 + $0x818] sm:$0xff]
    %v376 = vld [vmem:[#allocation4 + $0x820] sm:$0xff]
    %v377 = vld [vmem:[#allocation4 + $0x828] sm:$0xff]
    %v378 = vld [vmem:[#allocation4 + $0x830] sm:$0xff]
    %v379 = vld [vmem:[#allocation4 + $0x838] sm:$0xff]
    %v380 = vld [vmem:[#allocation4 + $0x840] sm:$0xff]
    %v381 = vld [vmem:[#allocation4 + $0x848] sm:$0xff]
    %v382 = vld [vmem:[#allocation4 + $0x850] sm:$0xff]
    %v383 = vld [vmem:[#allocation4 + $0x858] sm:$0xff]
    %v384 = vld [vmem:[#allocation4 + $0x860] sm:$0xff]
    %v385 = vld [vmem:[#allocation4 + $0x868] sm:$0xff]
    %v386 = vld [vmem:[#allocation4 + $0x870] sm:$0xff]
    %v387 = vld [vmem:[#allocation4 + $0x878] sm:$0xff]
    %v388 = vld [vmem:[#allocation4 + $0x880] sm:$0xff]
    %v389 = vld [vmem:[#allocation4 + $0x888] sm:$0xff]
    %v390 = vld [vmem:[#allocation4 + $0x890] sm:$0xff]
    %v391 = vld [vmem:[#allocation4 + $0x898] sm:$0xff]
    %v392 = vld [vmem:[#allocation4 + $0x8a0] sm:$0xff]
    %v393 = vld [vmem:[#allocation4 + $0x8a8] sm:$0xff]
    %v394 = vld [vmem:[#allocation4 + $0x8b0] sm:$0xff]
    %v395 = vld [vmem:[#allocation4 + $0x8b8] sm:$0xff]
    %v396 = vld [vmem:[#allocation4 + $0x8c0] sm:$0xff]
    %v397 = vld [vmem:[#allocation4 + $0x8c8] sm:$0xff]
    %v398 = vld [vmem:[#allocation4 + $0x8d0] sm:$0xff]
    %v399 = vld [vmem:[#allocation4 + $0x8d8] sm:$0xff]
    %v400 = vld [vmem:[#allocation4 + $0x8e0] sm:$0xff]
    %v401 = vld [vmem:[#allocation4 + $0x8e8] sm:$0xff]
    %v402 = vld [vmem:[#allocation4 + $0x8f0] sm:$0xff]
    %v403 = vld [vmem:[#allocation4 + $0x8f8] sm:$0xff]
    %v404 = vld [vmem:[#allocation4 + $0x900] sm:$0xff]
    %v405 = vld [vmem:[#allocation4 + $0x908] sm:$0xff]
    %v406 = vld [vmem:[#allocation4 + $0x910] sm:$0xff]
    %v407 = vld [vmem:[#allocation4 + $0x918] sm:$0xff]
    %v408 = vld [vmem:[#allocation4 + $0x920] sm:$0xff]
    %v409 = vld [vmem:[#allocation4 + $0x928] sm:$0xff]
    %v410 = vld [vmem:[#allocation4 + $0x930] sm:$0xff]
    %v411 = vld [vmem:[#allocation4 + $0x938] sm:$0xff]
    %v412 = vld [vmem:[#allocation4 + $0x940] sm:$0xff]
    %v413 = vld [vmem:[#allocation4 + $0x948] sm:$0xff]
    %v414 = vld [vmem:[#allocation4 + $0x950] sm:$0xff]
    %v415 = vld [vmem:[#allocation4 + $0x958] sm:$0xff]
    %v416 = vld [vmem:[#allocation4 + $0x960] sm:$0xff]
    %v417 = vld [vmem:[#allocation4 + $0x968] sm:$0xff]
    %v418 = vld [vmem:[#allocation4 + $0x970] sm:$0xff]
    %v419 = vld [vmem:[#allocation4 + $0x978] sm:$0xff]
    %v420 = vld [vmem:[#allocation4 + $0x980] sm:$0xff]
    %v421 = vld [vmem:[#allocation4 + $0x988] sm:$0xff]
    %v422 = vld [vmem:[#allocation4 + $0x990] sm:$0xff]
    %v423 = vld [vmem:[#allocation4 + $0x998] sm:$0xff]
    %v424 = vld [vmem:[#allocation4 + $0x9a0] sm:$0xff]
    %v425 = vld [vmem:[#allocation4 + $0x9a8] sm:$0xff]
    %v426 = vld [vmem:[#allocation4 + $0x9b0] sm:$0xff]
    %v427 = vld [vmem:[#allocation4 + $0x9b8] sm:$0xff]
    %v428 = vld [vmem:[#allocation4 + $0x9c0] sm:$0xff]
    %v429 = vld [vmem:[#allocation4 + $0x9c8] sm:$0xff]
    %v430 = vld [vmem:[#allocation4 + $0x9d0] sm:$0xff]
    %v431 = vld [vmem:[#allocation4 + $0x9d8] sm:$0xff]
    %v432 = vld [vmem:[#allocation4 + $0x9e0] sm:$0xff]
    %v433 = vld [vmem:[#allocation4 + $0x9e8] sm:$0xff]
    %v434 = vld [vmem:[#allocation4 + $0x9f0] sm:$0xff]
    %v435 = vld [vmem:[#allocation4 + $0x9f8] sm:$0xff]
    %v436 = vld [vmem:[#allocation4 + $0xa00] sm:$0xff]
    %v437 = vld [vmem:[#allocation4 + $0xa08] sm:$0xff]
    %v438 = vld [vmem:[#allocation4 + $0xa10] sm:$0xff]
    %v439 = vld [vmem:[#allocation4 + $0xa18] sm:$0xff]
    %v440 = vld [vmem:[#allocation4 + $0xa20] sm:$0xff]
    %v441 = vld [vmem:[#allocation4 + $0xa28] sm:$0xff]
    %v442 = vld [vmem:[#allocation4 + $0xa30] sm:$0xff]
    %v443 = vld [vmem:[#allocation4 + $0xa38] sm:$0xff]
    %v444 = vld [vmem:[#allocation4 + $0xa40] sm:$0xff]
    %v445 = vld [vmem:[#allocation4 + $0xa48] sm:$0xff]
    %v446 = vld [vmem:[#allocation4 + $0xa50] sm:$0xff]
    %v447 = vld [vmem:[#allocation4 + $0xa58] sm:$0xff]
    %v448 = vld [vmem:[#allocation4 + $0xa60] sm:$0xff]
    %v449 = vld [vmem:[#allocation4 + $0xa68] sm:$0xff]
    %v450 = vld [vmem:[#allocation4 + $0xa70] sm:$0xff]
    %v451 = vld [vmem:[#allocation4 + $0xa78] sm:$0xff]
    %v452 = vld [vmem:[#allocation4 + $0xa80] sm:$0xff]
    %v453 = vld [vmem:[#allocation4 + $0xa88] sm:$0xff]
    %v454 = vld [vmem:[#allocation4 + $0xa90] sm:$0xff]
    %v455 = vld [vmem:[#allocation4 + $0xa98] sm:$0xff]
    %v456 = vld [vmem:[#allocation4 + $0xaa0] sm:$0xff]
    %v457 = vld [vmem:[#allocation4 + $0xaa8] sm:$0xff]
    %v458 = vld [vmem:[#allocation4 + $0xab0] sm:$0xff]
    %v459 = vld [vmem:[#allocation4 + $0xab8] sm:$0xff]
    %v460 = vld [vmem:[#allocation4 + $0xac0] sm:$0xff]
    %v461 = vld [vmem:[#allocation4 + $0xac8] sm:$0xff]
    %v462 = vld [vmem:[#allocation4 + $0xad0] sm:$0xff]
    %v463 = vld [vmem:[#allocation4 + $0xad8] sm:$0xff]
    %v464 = vld [vmem:[#allocation4 + $0xae0] sm:$0xff]
    %v465 = vld [vmem:[#allocation4 + $0xae8] sm:$0xff]
    %v466 = vld [vmem:[#allocation4 + $0xaf0] sm:$0xff]
    %v467 = vld [vmem:[#allocation4 + $0xaf8] sm:$0xff]
    %v468 = vld [vmem:[#allocation4 + $0xb00] sm:$0xff]
    %v469 = vld [vmem:[#allocation4 + $0xb08] sm:$0xff]
    %v470 = vld [vmem:[#allocation4 + $0xb10] sm:$0xff]
    %v471 = vld [vmem:[#allocation4 + $0xb18] sm:$0xff]
    %v472 = vld [vmem:[#allocation4 + $0xb20] sm:$0xff]
    %v473 = vld [vmem:[#allocation4 + $0xb28] sm:$0xff]
    %v474 = vld [vmem:[#allocation4 + $0xb30] sm:$0xff]
    %v475 = vld [vmem:[#allocation4 + $0xb38] sm:$0xff]
    %v476 = vld [vmem:[#allocation4 + $0xb40] sm:$0xff]
    %v477 = vld [vmem:[#allocation4 + $0xb48] sm:$0xff]
    %v478 = vld [vmem:[#allocation4 + $0xb50] sm:$0xff]
    %v479 = vld [vmem:[#allocation4 + $0xb58] sm:$0xff]
    %v480 = vld [vmem:[#allocation4 + $0xb60] sm:$0xff]
    %v481 = vld [vmem:[#allocation4 + $0xb68] sm:$0xff]
    %v482 = vld [vmem:[#allocation4 + $0xb70] sm:$0xff]
    %v483 = vld [vmem:[#allocation4 + $0xb78] sm:$0xff]
    %v484 = vld [vmem:[#allocation4 + $0xb80] sm:$0xff]
    %v485 = vld [vmem:[#allocation4 + $0xb88] sm:$0xff]
    %v486 = vld [vmem:[#allocation4 + $0xb90] sm:$0xff]
    %v487 = vld [vmem:[#allocation4 + $0xb98] sm:$0xff]
    %v488 = vld [vmem:[#allocation4 + $0xba0] sm:$0xff]
    %v489 = vld [vmem:[#allocation4 + $0xba8] sm:$0xff]
    %v490 = vld [vmem:[#allocation4 + $0xbb0] sm:$0xff]
    %v491 = vld [vmem:[#allocation4 + $0xbb8] sm:$0xff]
    %v492 = vld [vmem:[#allocation4 + $0xbc0] sm:$0xff]
    %v493 = vld [vmem:[#allocation4 + $0xbc8] sm:$0xff]
    %v494 = vld [vmem:[#allocation4 + $0xbd0] sm:$0xff]
    %v495 = vld [vmem:[#allocation4 + $0xbd8] sm:$0xff]
    %v496 = vld [vmem:[#allocation4 + $0xbe0] sm:$0xff]
    %v497 = vld [vmem:[#allocation4 + $0xbe8] sm:$0xff]
    %v498 = vld [vmem:[#allocation4 + $0xbf0] sm:$0xff]
    %v499 = vld [vmem:[#allocation4 + $0xbf8] sm:$0xff]
    %v500 = vld [vmem:[#allocation6] sm:$0xff]
    %v502 = vperm.slane %v500, 0
    %v503 = vperm.slane %v500, 1
    %v504 = vperm.slane %v500, 2
    %v505 = vperm.slane %v500, 3
    %v506 = vperm.slane %v500, 4
    %v507 = vperm.slane %v500, 5
    %v508 = vperm.slane %v500, 6
    %v509 = vperm.slane %v500, 7
    %518 = vmatpush.msra.mxu0 %v236
    %519 = vmatpush.msra.mxu0 %v228
    %520 = vmatpush.msra.mxu0 %v220
    %521 = vmatpush.msra.mxu0 %v212
    %522 = vmatpush.msra.mxu0 %v204
    %523 = vmatpush.msra.mxu0 %v196
    %524 = vmatpush.msra.mxu0 %v188
    %525 = vmatpush.msra.mxu0 %v180
    %526 = vmatpush.msra.mxu0 %v172
    %527 = vmatpush.msra.mxu0 %v164
    %528 = vmatpush.msra.mxu0 %v156
    %529 = vmatpush.msra.mxu0 %v148
    %530 = vmatpush.msra.mxu0 %v140
    %531 = vmatpush.msra.mxu0 %v132
    %532 = vmatpush.msra.mxu0 %v124
    %533 = vmatpush.msra.mxu0 %v116
    %534 = vmatmul.f32.gmra.mxu0 %v113
    %v535 = vpop.f32.mrf.mxu0
    %v536 = vadd.f32 %v502, %v535
    %537 = vdwg.mxu0
    %538 = vmatpush.msra.mxu0 %v364
    %539 = vmatpush.msra.mxu0 %v356
    %540 = vmatpush.msra.mxu0 %v348
    %541 = vmatpush.msra.mxu0 %v340
    %542 = vmatpush.msra.mxu0 %v332
    %543 = vmatpush.msra.mxu0 %v324
    %544 = vmatpush.msra.mxu0 %v316
    %545 = vmatpush.msra.mxu0 %v308
    %546 = vmatpush.msra.mxu0 %v300
    %547 = vmatpush.msra.mxu0 %v292
    %548 = vmatpush.msra.mxu0 %v284
    %549 = vmatpush.msra.mxu0 %v276
    %550 = vmatpush.msra.mxu0 %v268
    %551 = vmatpush.msra.mxu0 %v260
    %552 = vmatpush.msra.mxu0 %v252
    %553 = vmatpush.msra.mxu0 %v244
    %554 = vmatmul.f32.gmra.mxu0 %v114
    %v555 = vpop.f32.mrf.mxu0
    %v556 = vadd.f32 %v536, %v555
    %557 = vdwg.mxu0
    %558 = vmatpush.msra.mxu0 %v492
    %559 = vmatpush.msra.mxu0 %v484
    %560 = vmatpush.msra.mxu0 %v476
    %561 = vmatpush.msra.mxu0 %v468
    %562 = vmatpush.msra.mxu0 %v460
    %563 = vmatpush.msra.mxu0 %v452
    %564 = vmatpush.msra.mxu0 %v444
    %565 = vmatpush.msra.mxu0 %v436
    %566 = vmatpush.msra.mxu0 %v428
    %567 = vmatpush.msra.mxu0 %v420
    %568 = vmatpush.msra.mxu0 %v412
    %569 = vmatpush.msra.mxu0 %v404
    %570 = vmatpush.msra.mxu0 %v396
    %571 = vmatpush.msra.mxu0 %v388
    %572 = vmatpush.msra.mxu0 %v380
    %573 = vmatpush.msra.mxu0 %v372
    %574 = vmatmul.f32.gmra.mxu0 %v115
    %v575 = vpop.f32.mrf.mxu0
    %v576 = vadd.f32 %v556, %v575
    %577 = vdwg.mxu0
    %578 = vmatpush.msra.mxu0 %v237
    %579 = vmatpush.msra.mxu0 %v229
    %580 = vmatpush.msra.mxu0 %v221
    %581 = vmatpush.msra.mxu0 %v213
    %582 = vmatpush.msra.mxu0 %v205
    %583 = vmatpush.msra.mxu0 %v197
    %584 = vmatpush.msra.mxu0 %v189
    %585 = vmatpush.msra.mxu0 %v181
    %586 = vmatpush.msra.mxu0 %v173
    %587 = vmatpush.msra.mxu0 %v165
    %588 = vmatpush.msra.mxu0 %v157
    %589 = vmatpush.msra.mxu0 %v149
    %590 = vmatpush.msra.mxu0 %v141
    %591 = vmatpush.msra.mxu0 %v133
    %592 = vmatpush.msra.mxu0 %v125
    %593 = vmatpush.msra.mxu0 %v117
    %594 = vmatmul.f32.gmra.mxu0 %v113
    %v595 = vpop.f32.mrf.mxu0
    %v596 = vadd.f32 %v503, %v595
    %597 = vdwg.mxu0
    %598 = vmatpush.msra.mxu0 %v365
    %599 = vmatpush.msra.mxu0 %v357
    %600 = vmatpush.msra.mxu0 %v349
    %601 = vmatpush.msra.mxu0 %v341
    %602 = vmatpush.msra.mxu0 %v333
    %603 = vmatpush.msra.mxu0 %v325
    %604 = vmatpush.msra.mxu0 %v317
    %605 = vmatpush.msra.mxu0 %v309
    %606 = vmatpush.msra.mxu0 %v301
    %607 = vmatpush.msra.mxu0 %v293
    %608 = vmatpush.msra.mxu0 %v285
    %609 = vmatpush.msra.mxu0 %v277
    %610 = vmatpush.msra.mxu0 %v269
    %611 = vmatpush.msra.mxu0 %v261
    %612 = vmatpush.msra.mxu0 %v253
    %613 = vmatpush.msra.mxu0 %v245
    %614 = vmatmul.f32.gmra.mxu0 %v114
    %v615 = vpop.f32.mrf.mxu0
    %v616 = vadd.f32 %v596, %v615
    %617 = vdwg.mxu0
    %618 = vmatpush.msra.mxu0 %v493
    %619 = vmatpush.msra.mxu0 %v485
    %620 = vmatpush.msra.mxu0 %v477
    %621 = vmatpush.msra.mxu0 %v469
    %622 = vmatpush.msra.mxu0 %v461
    %623 = vmatpush.msra.mxu0 %v453
    %624 = vmatpush.msra.mxu0 %v445
    %625 = vmatpush.msra.mxu0 %v437
    %626 = vmatpush.msra.mxu0 %v429
    %627 = vmatpush.msra.mxu0 %v421
    %628 = vmatpush.msra.mxu0 %v413
    %629 = vmatpush.msra.mxu0 %v405
    %630 = vmatpush.msra.mxu0 %v397
    %631 = vmatpush.msra.mxu0 %v389
    %632 = vmatpush.msra.mxu0 %v381
    %633 = vmatpush.msra.mxu0 %v373
    %634 = vmatmul.f32.gmra.mxu0 %v115
    %v635 = vpop.f32.mrf.mxu0
    %v636 = vadd.f32 %v616, %v635
    %637 = vdwg.mxu0
    %638 = vmatpush.msra.mxu0 %v238
    %639 = vmatpush.msra.mxu0 %v230
    %640 = vmatpush.msra.mxu0 %v222
    %641 = vmatpush.msra.mxu0 %v214
    %642 = vmatpush.msra.mxu0 %v206
    %643 = vmatpush.msra.mxu0 %v198
    %644 = vmatpush.msra.mxu0 %v190
    %645 = vmatpush.msra.mxu0 %v182
    %646 = vmatpush.msra.mxu0 %v174
    %647 = vmatpush.msra.mxu0 %v166
    %648 = vmatpush.msra.mxu0 %v158
    %649 = vmatpush.msra.mxu0 %v150
    %650 = vmatpush.msra.mxu0 %v142
    %651 = vmatpush.msra.mxu0 %v134
    %652 = vmatpush.msra.mxu0 %v126
    %653 = vmatpush.msra.mxu0 %v118
    %654 = vmatmul.f32.gmra.mxu0 %v113
    %v655 = vpop.f32.mrf.mxu0
    %v656 = vadd.f32 %v504, %v655
    %657 = vdwg.mxu0
    %658 = vmatpush.msra.mxu0 %v366
    %659 = vmatpush.msra.mxu0 %v358
    %660 = vmatpush.msra.mxu0 %v350
    %661 = vmatpush.msra.mxu0 %v342
    %662 = vmatpush.msra.mxu0 %v334
    %663 = vmatpush.msra.mxu0 %v326
    %664 = vmatpush.msra.mxu0 %v318
    %665 = vmatpush.msra.mxu0 %v310
    %666 = vmatpush.msra.mxu0 %v302
    %667 = vmatpush.msra.mxu0 %v294
    %668 = vmatpush.msra.mxu0 %v286
    %669 = vmatpush.msra.mxu0 %v278
    %670 = vmatpush.msra.mxu0 %v270
    %671 = vmatpush.msra.mxu0 %v262
    %672 = vmatpush.msra.mxu0 %v254
    %673 = vmatpush.msra.mxu0 %v246
    %674 = vmatmul.f32.gmra.mxu0 %v114
    %v675 = vpop.f32.mrf.mxu0
    %v676 = vadd.f32 %v656, %v675
    %677 = vdwg.mxu0
    %678 = vmatpush.msra.mxu0 %v494
    %679 = vmatpush.msra.mxu0 %v486
    %680 = vmatpush.msra.mxu0 %v478
    %681 = vmatpush.msra.mxu0 %v470
    %682 = vmatpush.msra.mxu0 %v462
    %683 = vmatpush.msra.mxu0 %v454
    %684 = vmatpush.msra.mxu0 %v446
    %685 = vmatpush.msra.mxu0 %v438
    %686 = vmatpush.msra.mxu0 %v430
    %687 = vmatpush.msra.mxu0 %v422
    %688 = vmatpush.msra.mxu0 %v414
    %689 = vmatpush.msra.mxu0 %v406
    %690 = vmatpush.msra.mxu0 %v398
    %691 = vmatpush.msra.mxu0 %v390
    %692 = vmatpush.msra.mxu0 %v382
    %693 = vmatpush.msra.mxu0 %v374
    %694 = vmatmul.f32.gmra.mxu0 %v115
    %v695 = vpop.f32.mrf.mxu0
    %v696 = vadd.f32 %v676, %v695
    %697 = vdwg.mxu0
    %698 = vmatpush.msra.mxu0 %v239
    %699 = vmatpush.msra.mxu0 %v231
    %700 = vmatpush.msra.mxu0 %v223
    %701 = vmatpush.msra.mxu0 %v215
    %702 = vmatpush.msra.mxu0 %v207
    %703 = vmatpush.msra.mxu0 %v199
    %704 = vmatpush.msra.mxu0 %v191
    %705 = vmatpush.msra.mxu0 %v183
    %706 = vmatpush.msra.mxu0 %v175
    %707 = vmatpush.msra.mxu0 %v167
    %708 = vmatpush.msra.mxu0 %v159
    %709 = vmatpush.msra.mxu0 %v151
    %710 = vmatpush.msra.mxu0 %v143
    %711 = vmatpush.msra.mxu0 %v135
    %712 = vmatpush.msra.mxu0 %v127
    %713 = vmatpush.msra.mxu0 %v119
    %714 = vmatmul.f32.gmra.mxu0 %v113
    %v715 = vpop.f32.mrf.mxu0
    %v716 = vadd.f32 %v505, %v715
    %717 = vdwg.mxu0
    %718 = vmatpush.msra.mxu0 %v367
    %719 = vmatpush.msra.mxu0 %v359
    %720 = vmatpush.msra.mxu0 %v351
    %721 = vmatpush.msra.mxu0 %v343
    %722 = vmatpush.msra.mxu0 %v335
    %723 = vmatpush.msra.mxu0 %v327
    %724 = vmatpush.msra.mxu0 %v319
    %725 = vmatpush.msra.mxu0 %v311
    %726 = vmatpush.msra.mxu0 %v303
    %727 = vmatpush.msra.mxu0 %v295
    %728 = vmatpush.msra.mxu0 %v287
    %729 = vmatpush.msra.mxu0 %v279
    %730 = vmatpush.msra.mxu0 %v271
    %731 = vmatpush.msra.mxu0 %v263
    %732 = vmatpush.msra.mxu0 %v255
    %733 = vmatpush.msra.mxu0 %v247
    %734 = vmatmul.f32.gmra.mxu0 %v114
    %v735 = vpop.f32.mrf.mxu0
    %v736 = vadd.f32 %v716, %v735
    %737 = vdwg.mxu0
    %738 = vmatpush.msra.mxu0 %v495
    %739 = vmatpush.msra.mxu0 %v487
    %740 = vmatpush.msra.mxu0 %v479
    %741 = vmatpush.msra.mxu0 %v471
    %742 = vmatpush.msra.mxu0 %v463
    %743 = vmatpush.msra.mxu0 %v455
    %744 = vmatpush.msra.mxu0 %v447
    %745 = vmatpush.msra.mxu0 %v439
    %746 = vmatpush.msra.mxu0 %v431
    %747 = vmatpush.msra.mxu0 %v423
    %748 = vmatpush.msra.mxu0 %v415
    %749 = vmatpush.msra.mxu0 %v407
    %750 = vmatpush.msra.mxu0 %v399
    %751 = vmatpush.msra.mxu0 %v391
    %752 = vmatpush.msra.mxu0 %v383
    %753 = vmatpush.msra.mxu0 %v375
    %754 = vmatmul.f32.gmra.mxu0 %v115
    %v755 = vpop.f32.mrf.mxu0
    %v756 = vadd.f32 %v736, %v755
    %757 = vdwg.mxu0
    %758 = vmatpush.msra.mxu0 %v240
    %759 = vmatpush.msra.mxu0 %v232
    %760 = vmatpush.msra.mxu0 %v224
    %761 = vmatpush.msra.mxu0 %v216
    %762 = vmatpush.msra.mxu0 %v208
    %763 = vmatpush.msra.mxu0 %v200
    %764 = vmatpush.msra.mxu0 %v192
    %765 = vmatpush.msra.mxu0 %v184
    %766 = vmatpush.msra.mxu0 %v176
    %767 = vmatpush.msra.mxu0 %v168
    %768 = vmatpush.msra.mxu0 %v160
    %769 = vmatpush.msra.mxu0 %v152
    %770 = vmatpush.msra.mxu0 %v144
    %771 = vmatpush.msra.mxu0 %v136
    %772 = vmatpush.msra.mxu0 %v128
    %773 = vmatpush.msra.mxu0 %v120
    %774 = vmatmul.f32.gmra.mxu0 %v113
    %v775 = vpop.f32.mrf.mxu0
    %v776 = vadd.f32 %v506, %v775
    %777 = vdwg.mxu0
    %778 = vmatpush.msra.mxu0 %v368
    %779 = vmatpush.msra.mxu0 %v360
    %780 = vmatpush.msra.mxu0 %v352
    %781 = vmatpush.msra.mxu0 %v344
    %782 = vmatpush.msra.mxu0 %v336
    %783 = vmatpush.msra.mxu0 %v328
    %784 = vmatpush.msra.mxu0 %v320
    %785 = vmatpush.msra.mxu0 %v312
    %786 = vmatpush.msra.mxu0 %v304
    %787 = vmatpush.msra.mxu0 %v296
    %788 = vmatpush.msra.mxu0 %v288
    %789 = vmatpush.msra.mxu0 %v280
    %790 = vmatpush.msra.mxu0 %v272
    %791 = vmatpush.msra.mxu0 %v264
    %792 = vmatpush.msra.mxu0 %v256
    %793 = vmatpush.msra.mxu0 %v248
    %794 = vmatmul.f32.gmra.mxu0 %v114
    %v795 = vpop.f32.mrf.mxu0
    %v796 = vadd.f32 %v776, %v795
    %797 = vdwg.mxu0
    %798 = vmatpush.msra.mxu0 %v496
    %799 = vmatpush.msra.mxu0 %v488
    %800 = vmatpush.msra.mxu0 %v480
    %801 = vmatpush.msra.mxu0 %v472
    %802 = vmatpush.msra.mxu0 %v464
    %803 = vmatpush.msra.mxu0 %v456
    %804 = vmatpush.msra.mxu0 %v448
    %805 = vmatpush.msra.mxu0 %v440
    %806 = vmatpush.msra.mxu0 %v432
    %807 = vmatpush.msra.mxu0 %v424
    %808 = vmatpush.msra.mxu0 %v416
    %809 = vmatpush.msra.mxu0 %v408
    %810 = vmatpush.msra.mxu0 %v400
    %811 = vmatpush.msra.mxu0 %v392
    %812 = vmatpush.msra.mxu0 %v384
    %813 = vmatpush.msra.mxu0 %v376
    %814 = vmatmul.f32.gmra.mxu0 %v115
    %v815 = vpop.f32.mrf.mxu0
    %v816 = vadd.f32 %v796, %v815
    %817 = vdwg.mxu0
    %818 = vmatpush.msra.mxu0 %v241
    %819 = vmatpush.msra.mxu0 %v233
    %820 = vmatpush.msra.mxu0 %v225
    %821 = vmatpush.msra.mxu0 %v217
    %822 = vmatpush.msra.mxu0 %v209
    %823 = vmatpush.msra.mxu0 %v201
    %824 = vmatpush.msra.mxu0 %v193
    %825 = vmatpush.msra.mxu0 %v185
    %826 = vmatpush.msra.mxu0 %v177
    %827 = vmatpush.msra.mxu0 %v169
    %828 = vmatpush.msra.mxu0 %v161
    %829 = vmatpush.msra.mxu0 %v153
    %830 = vmatpush.msra.mxu0 %v145
    %831 = vmatpush.msra.mxu0 %v137
    %832 = vmatpush.msra.mxu0 %v129
    %833 = vmatpush.msra.mxu0 %v121
    %834 = vmatmul.f32.gmra.mxu0 %v113
    %v835 = vpop.f32.mrf.mxu0
    %v836 = vadd.f32 %v507, %v835
    %837 = vdwg.mxu0
    %838 = vmatpush.msra.mxu0 %v369
    %839 = vmatpush.msra.mxu0 %v361
    %840 = vmatpush.msra.mxu0 %v353
    %841 = vmatpush.msra.mxu0 %v345
    %842 = vmatpush.msra.mxu0 %v337
    %843 = vmatpush.msra.mxu0 %v329
    %844 = vmatpush.msra.mxu0 %v321
    %845 = vmatpush.msra.mxu0 %v313
    %846 = vmatpush.msra.mxu0 %v305
    %847 = vmatpush.msra.mxu0 %v297
    %848 = vmatpush.msra.mxu0 %v289
    %849 = vmatpush.msra.mxu0 %v281
    %850 = vmatpush.msra.mxu0 %v273
    %851 = vmatpush.msra.mxu0 %v265
    %852 = vmatpush.msra.mxu0 %v257
    %853 = vmatpush.msra.mxu0 %v249
    %854 = vmatmul.f32.gmra.mxu0 %v114
    %v855 = vpop.f32.mrf.mxu0
    %v856 = vadd.f32 %v836, %v855
    %857 = vdwg.mxu0
    %858 = vmatpush.msra.mxu0 %v497
    %859 = vmatpush.msra.mxu0 %v489
    %860 = vmatpush.msra.mxu0 %v481
    %861 = vmatpush.msra.mxu0 %v473
    %862 = vmatpush.msra.mxu0 %v465
    %863 = vmatpush.msra.mxu0 %v457
    %864 = vmatpush.msra.mxu0 %v449
    %865 = vmatpush.msra.mxu0 %v441
    %866 = vmatpush.msra.mxu0 %v433
    %867 = vmatpush.msra.mxu0 %v425
    %868 = vmatpush.msra.mxu0 %v417
    %869 = vmatpush.msra.mxu0 %v409
    %870 = vmatpush.msra.mxu0 %v401
    %871 = vmatpush.msra.mxu0 %v393
    %872 = vmatpush.msra.mxu0 %v385
    %873 = vmatpush.msra.mxu0 %v377
    %874 = vmatmul.f32.gmra.mxu0 %v115
    %v875 = vpop.f32.mrf.mxu0
    %v876 = vadd.f32 %v856, %v875
    %877 = vdwg.mxu0
    %878 = vmatpush.msra.mxu0 %v242
    %879 = vmatpush.msra.mxu0 %v234
    %880 = vmatpush.msra.mxu0 %v226
    %881 = vmatpush.msra.mxu0 %v218
    %882 = vmatpush.msra.mxu0 %v210
    %883 = vmatpush.msra.mxu0 %v202
    %884 = vmatpush.msra.mxu0 %v194
    %885 = vmatpush.msra.mxu0 %v186
    %886 = vmatpush.msra.mxu0 %v178
    %887 = vmatpush.msra.mxu0 %v170
    %888 = vmatpush.msra.mxu0 %v162
    %889 = vmatpush.msra.mxu0 %v154
    %890 = vmatpush.msra.mxu0 %v146
    %891 = vmatpush.msra.mxu0 %v138
    %892 = vmatpush.msra.mxu0 %v130
    %893 = vmatpush.msra.mxu0 %v122
    %894 = vmatmul.f32.gmra.mxu0 %v113
    %v895 = vpop.f32.mrf.mxu0
    %v896 = vadd.f32 %v508, %v895
    %897 = vdwg.mxu0
    %898 = vmatpush.msra.mxu0 %v370
    %899 = vmatpush.msra.mxu0 %v362
    %900 = vmatpush.msra.mxu0 %v354
    %901 = vmatpush.msra.mxu0 %v346
    %902 = vmatpush.msra.mxu0 %v338
    %903 = vmatpush.msra.mxu0 %v330
    %904 = vmatpush.msra.mxu0 %v322
    %905 = vmatpush.msra.mxu0 %v314
    %906 = vmatpush.msra.mxu0 %v306
    %907 = vmatpush.msra.mxu0 %v298
    %908 = vmatpush.msra.mxu0 %v290
    %909 = vmatpush.msra.mxu0 %v282
    %910 = vmatpush.msra.mxu0 %v274
    %911 = vmatpush.msra.mxu0 %v266
    %912 = vmatpush.msra.mxu0 %v258
    %913 = vmatpush.msra.mxu0 %v250
    %914 = vmatmul.f32.gmra.mxu0 %v114
    %v915 = vpop.f32.mrf.mxu0
    %v916 = vadd.f32 %v896, %v915
    %917 = vdwg.mxu0
    %918 = vmatpush.msra.mxu0 %v498
    %919 = vmatpush.msra.mxu0 %v490
    %920 = vmatpush.msra.mxu0 %v482
    %921 = vmatpush.msra.mxu0 %v474
    %922 = vmatpush.msra.mxu0 %v466
    %923 = vmatpush.msra.mxu0 %v458
    %924 = vmatpush.msra.mxu0 %v450
    %925 = vmatpush.msra.mxu0 %v442
    %926 = vmatpush.msra.mxu0 %v434
    %927 = vmatpush.msra.mxu0 %v426
    %928 = vmatpush.msra.mxu0 %v418
    %929 = vmatpush.msra.mxu0 %v410
    %930 = vmatpush.msra.mxu0 %v402
    %931 = vmatpush.msra.mxu0 %v394
    %932 = vmatpush.msra.mxu0 %v386
    %933 = vmatpush.msra.mxu0 %v378
    %934 = vmatmul.f32.gmra.mxu0 %v115
    %v935 = vpop.f32.mrf.mxu0
    %v936 = vadd.f32 %v916, %v935
    %937 = vdwg.mxu0
    %938 = vmatpush.msra.mxu0 %v243
    %939 = vmatpush.msra.mxu0 %v235
    %940 = vmatpush.msra.mxu0 %v227
    %941 = vmatpush.msra.mxu0 %v219
    %942 = vmatpush.msra.mxu0 %v211
    %943 = vmatpush.msra.mxu0 %v203
    %944 = vmatpush.msra.mxu0 %v195
    %945 = vmatpush.msra.mxu0 %v187
    %946 = vmatpush.msra.mxu0 %v179
    %947 = vmatpush.msra.mxu0 %v171
    %948 = vmatpush.msra.mxu0 %v163
    %949 = vmatpush.msra.mxu0 %v155
    %950 = vmatpush.msra.mxu0 %v147
    %951 = vmatpush.msra.mxu0 %v139
    %952 = vmatpush.msra.mxu0 %v131
    %953 = vmatpush.msra.mxu0 %v123
    %954 = vmatmul.f32.gmra.mxu0 %v113
    %v955 = vpop.f32.mrf.mxu0
    %v956 = vadd.f32 %v509, %v955
    %957 = vdwg.mxu0
    %958 = vmatpush.msra.mxu0 %v371
    %959 = vmatpush.msra.mxu0 %v363
    %960 = vmatpush.msra.mxu0 %v355
    %961 = vmatpush.msra.mxu0 %v347
    %962 = vmatpush.msra.mxu0 %v339
    %963 = vmatpush.msra.mxu0 %v331
    %964 = vmatpush.msra.mxu0 %v323
    %965 = vmatpush.msra.mxu0 %v315
    %966 = vmatpush.msra.mxu0 %v307
    %967 = vmatpush.msra.mxu0 %v299
    %968 = vmatpush.msra.mxu0 %v291
    %969 = vmatpush.msra.mxu0 %v283
    %970 = vmatpush.msra.mxu0 %v275
    %971 = vmatpush.msra.mxu0 %v267
    %972 = vmatpush.msra.mxu0 %v259
    %973 = vmatpush.msra.mxu0 %v251
    %974 = vmatmul.f32.gmra.mxu0 %v114
    %v975 = vpop.f32.mrf.mxu0
    %v976 = vadd.f32 %v956, %v975
    %977 = vdwg.mxu0
    %978 = vmatpush.msra.mxu0 %v499
    %979 = vmatpush.msra.mxu0 %v491
    %980 = vmatpush.msra.mxu0 %v483
    %981 = vmatpush.msra.mxu0 %v475
    %982 = vmatpush.msra.mxu0 %v467
    %983 = vmatpush.msra.mxu0 %v459
    %984 = vmatpush.msra.mxu0 %v451
    %985 = vmatpush.msra.mxu0 %v443
    %986 = vmatpush.msra.mxu0 %v435
    %987 = vmatpush.msra.mxu0 %v427
    %988 = vmatpush.msra.mxu0 %v419
    %989 = vmatpush.msra.mxu0 %v411
    %990 = vmatpush.msra.mxu0 %v403
    %991 = vmatpush.msra.mxu0 %v395
    %992 = vmatpush.msra.mxu0 %v387
    %993 = vmatpush.msra.mxu0 %v379
    %994 = vmatmul.f32.gmra.mxu0 %v115
    %v995 = vpop.f32.mrf.mxu0
    %v996 = vadd.f32 %v976, %v995
    %997 = vdwg.mxu0
    %v998 = vadd.f32 %v576, %v636
    %999 = vadd.xlane.f32.xlu0 %v998
    %v1000 = vpop.xlane.xlu0 %999
    %v1001 = vrcp.pop 256.0
    %v1002 = vmul.f32 256.0, %v1001
    %v1003 = vsub.f32 1.0, %v1002
    %v1004 = vmul.f32 %v1001, %v1003
    %v1005 = vadd.f32 %v1001, %v1004
    %vm1006 = vweird.f32 %v1001
    %v1007 = vsel %vm1006, %v1001, %v1005
    %v1008 = vmul.f32 %v1000, %v1007
    %v1009 = vsub.f32 %v576, %v1008
    %v1010 = vsub.f32 %v636, %v1008
    %v1011 = vmul.f32 %v1009, %v1009
    %v1012 = vmul.f32 %v1010, %v1010
    %v1013 = vadd.f32 %v1011, %v1012
    %1014 = vadd.xlane.f32.xlu0 %v1013
    %v1015 = vpop.xlane.xlu0 %1014
    %v1016 = vmul.f32 %v1015, %v1007
    %v1017 = vadd.f32 %v1016, 1e-05
    %v1018 = vrsqrt.pop %v1017
    %v1019 = vmul.f32 %v1018, %v1017
    %v1020 = vmul.f32 %v1019, %v1018
    %v1021 = vmul.f32 0.5, %v1020
    %v1022 = vsub.f32 1.5, %v1021
    %v1023 = vmul.f32 %v1018, %v1022
    %vm1024 = vweird.f32 %v1017
    %vm1025 = vweird.f32 %v1018
    %vm1026 = vmor %vm1024, %vm1025
    %v1027 = vsel %vm1026, %v1018, %v1023
    %v1028 = vmul.f32 %v1009, %v1027
    %v1029 = vmul.f32 %v1010, %v1027
    %v1030 = vld [vmem:[#allocation7] sm:$0x3]
    %v1032 = vperm.slane %v1030, 0
    %v1033 = vperm.slane %v1030, 1
    %v1036 = vmul.f32 %v1028, %v1032
    %v1037 = vmul.f32 %v1029, %v1033
    %v1038 = vld [vmem:[#allocation9] sm:$0x3]
    %v1040 = vperm.slane %v1038, 0
    %v1041 = vperm.slane %v1038, 1
    %v1044 = vadd.f32 %v1036, %v1040
    %v1045 = vadd.f32 %v1037, %v1041
    %v1046 = vmax.f32 %v1044, 0.0
    %v1047 = vmax.f32 %v1045, 0.0
    %v1048 = vadd.f32 %v696, %v756
    %1049 = vadd.xlane.f32.xlu0 %v1048
    %v1050 = vpop.xlane.xlu0 %1049
    %v1051 = vmul.f32 %v1050, %v1007
    %v1052 = vsub.f32 %v696, %v1051
    %v1053 = vsub.f32 %v756, %v1051
    %v1054 = vmul.f32 %v1052, %v1052
    %v1055 = vmul.f32 %v1053, %v1053
    %v1056 = vadd.f32 %v1054, %v1055
    %1057 = vadd.xlane.f32.xlu0 %v1056
    %v1058 = vpop.xlane.xlu0 %1057
    %v1059 = vmul.f32 %v1058, %v1007
    %v1060 = vadd.f32 %v1059, 1e-05
    %v1061 = vrsqrt.pop %v1060
    %v1062 = vmul.f32 %v1061, %v1060
    %v1063 = vmul.f32 %v1062, %v1061
    %v1064 = vmul.f32 0.5, %v1063
    %v1065 = vsub.f32 1.5, %v1064
    %v1066 = vmul.f32 %v1061, %v1065
    %vm1067 = vweird.f32 %v1060
    %vm1068 = vweird.f32 %v1061
    %vm1069 = vmor %vm1067, %vm1068
    %v1070 = vsel %vm1069, %v1061, %v1066
    %v1071 = vmul.f32 %v1052, %v1070
    %v1072 = vmul.f32 %v1053, %v1070
    %v1073 = vld [vmem:[#allocation7 + $0x2] sm:$0x3]
    %v1075 = vperm.slane %v1073, 0
    %v1076 = vperm.slane %v1073, 1
    %v1079 = vmul.f32 %v1071, %v1075
    %v1080 = vmul.f32 %v1072, %v1076
    %v1081 = vld [vmem:[#allocation9 + $0x2] sm:$0x3]
    %v1083 = vperm.slane %v1081, 0
    %v1084 = vperm.slane %v1081, 1
    %v1087 = vadd.f32 %v1079, %v1083
    %v1088 = vadd.f32 %v1080, %v1084
    %v1089 = vmax.f32 %v1087, 0.0
    %v1090 = vmax.f32 %v1088, 0.0
    %v1091 = vadd.f32 %v816, %v876
    %1092 = vadd.xlane.f32.xlu0 %v1091
    %v1093 = vpop.xlane.xlu0 %1092
    %v1094 = vmul.f32 %v1093, %v1007
    %v1095 = vsub.f32 %v816, %v1094
    %v1096 = vsub.f32 %v876, %v1094
    %v1097 = vmul.f32 %v1095, %v1095
    %v1098 = vmul.f32 %v1096, %v1096
    %v1099 = vadd.f32 %v1097, %v1098
    %1100 = vadd.xlane.f32.xlu0 %v1099
    %v1101 = vpop.xlane.xlu0 %1100
    %v1102 = vmul.f32 %v1101, %v1007
    %v1103 = vadd.f32 %v1102, 1e-05
    %v1104 = vrsqrt.pop %v1103
    %v1105 = vmul.f32 %v1104, %v1103
    %v1106 = vmul.f32 %v1105, %v1104
    %v1107 = vmul.f32 0.5, %v1106
    %v1108 = vsub.f32 1.5, %v1107
    %v1109 = vmul.f32 %v1104, %v1108
    %vm1110 = vweird.f32 %v1103
    %vm1111 = vweird.f32 %v1104
    %vm1112 = vmor %vm1110, %vm1111
    %v1113 = vsel %vm1112, %v1104, %v1109
    %v1114 = vmul.f32 %v1095, %v1113
    %v1115 = vmul.f32 %v1096, %v1113
    %v1116 = vld [vmem:[#allocation7 + $0x4] sm:$0x3]
    %v1118 = vperm.slane %v1116, 0
    %v1119 = vperm.slane %v1116, 1
    %v1122 = vmul.f32 %v1114, %v1118
    %v1123 = vmul.f32 %v1115, %v1119
    %v1124 = vld [vmem:[#allocation9 + $0x4] sm:$0x3]
    %v1126 = vperm.slane %v1124, 0
    %v1127 = vperm.slane %v1124, 1
    %v1130 = vadd.f32 %v1122, %v1126
    %v1131 = vadd.f32 %v1123, %v1127
    %v1132 = vmax.f32 %v1130, 0.0
    %v1133 = vmax.f32 %v1131, 0.0
    %v1134 = vadd.f32 %v936, %v996
    %1135 = vadd.xlane.f32.xlu0 %v1134
    %v1136 = vpop.xlane.xlu0 %1135
    %v1137 = vmul.f32 %v1136, %v1007
    %v1138 = vsub.f32 %v936, %v1137
    %v1139 = vsub.f32 %v996, %v1137
    %v1140 = vmul.f32 %v1138, %v1138
    %v1141 = vmul.f32 %v1139, %v1139
    %v1142 = vadd.f32 %v1140, %v1141
    %1143 = vadd.xlane.f32.xlu0 %v1142
    %v1144 = vpop.xlane.xlu0 %1143
    %v1145 = vmul.f32 %v1144, %v1007
    %v1146 = vadd.f32 %v1145, 1e-05
    %v1147 = vrsqrt.pop %v1146
    %v1148 = vmul.f32 %v1147, %v1146
    %v1149 = vmul.f32 %v1148, %v1147
    %v1150 = vmul.f32 0.5, %v1149
    %v1151 = vsub.f32 1.5, %v1150
    %v1152 = vmul.f32 %v1147, %v1151
    %vm1153 = vweird.f32 %v1146
    %vm1154 = vweird.f32 %v1147
    %vm1155 = vmor %vm1153, %vm1154
    %v1156 = vsel %vm1155, %v1147, %v1152
    %v1157 = vmul.f32 %v1138, %v1156
    %v1158 = vmul.f32 %v1139, %v1156
    %v1159 = vld [vmem:[#allocation7 + $0x6] sm:$0x3]
    %v1161 = vperm.slane %v1159, 0
    %v1162 = vperm.slane %v1159, 1
    %v1165 = vmul.f32 %v1157, %v1161
    %v1166 = vmul.f32 %v1158, %v1162
    %v1167 = vld [vmem:[#allocation9 + $0x6] sm:$0x3]
    %v1169 = vperm.slane %v1167, 0
    %v1170 = vperm.slane %v1167, 1
    %v1173 = vadd.f32 %v1165, %v1169
    %v1174 = vadd.f32 %v1166, %v1170
    %v1175 = vmax.f32 %v1173, 0.0
    %v1176 = vmax.f32 %v1174, 0.0
    %v1177 = vld [vmem:[%s6] sm:$0xff]
    %v1178 = vld [vmem:[%s6 + $0x8] sm:$0xff]
    %v1179 = vld [vmem:[%s6 + $0x10] sm:$0xff]
    %v1180 = vld [vmem:[%s6 + $0x18] sm:$0xff]
    %v1181 = vld [vmem:[%s6 + $0x20] sm:$0xff]
    %v1182 = vld [vmem:[%s6 + $0x28] sm:$0xff]
    %v1183 = vld [vmem:[%s6 + $0x30] sm:$0xff]
    %v1184 = vld [vmem:[%s6 + $0x38] sm:$0xff]
    %v1185 = vld [vmem:[%s6 + $0x40] sm:$0xff]
    %v1186 = vld [vmem:[%s6 + $0x48] sm:$0xff]
    %v1187 = vld [vmem:[%s6 + $0x50] sm:$0xff]
    %v1188 = vld [vmem:[%s6 + $0x58] sm:$0xff]
    %v1189 = vld [vmem:[%s6 + $0x60] sm:$0xff]
    %v1190 = vld [vmem:[%s6 + $0x68] sm:$0xff]
    %v1191 = vld [vmem:[%s6 + $0x70] sm:$0xff]
    %v1192 = vld [vmem:[%s6 + $0x78] sm:$0xff]
    %v1193 = vld [vmem:[%s6 + $0x80] sm:$0xff]
    %v1194 = vld [vmem:[%s6 + $0x88] sm:$0xff]
    %v1195 = vld [vmem:[%s6 + $0x90] sm:$0xff]
    %v1196 = vld [vmem:[%s6 + $0x98] sm:$0xff]
    %v1197 = vld [vmem:[%s6 + $0xa0] sm:$0xff]
    %v1198 = vld [vmem:[%s6 + $0xa8] sm:$0xff]
    %v1199 = vld [vmem:[%s6 + $0xb0] sm:$0xff]
    %v1200 = vld [vmem:[%s6 + $0xb8] sm:$0xff]
    %v1201 = vld [vmem:[%s6 + $0xc0] sm:$0xff]
    %v1202 = vld [vmem:[%s6 + $0xc8] sm:$0xff]
    %v1203 = vld [vmem:[%s6 + $0xd0] sm:$0xff]
    %v1204 = vld [vmem:[%s6 + $0xd8] sm:$0xff]
    %v1205 = vld [vmem:[%s6 + $0xe0] sm:$0xff]
    %v1206 = vld [vmem:[%s6 + $0xe8] sm:$0xff]
    %v1207 = vld [vmem:[%s6 + $0xf0] sm:$0xff]
    %v1208 = vld [vmem:[%s6 + $0xf8] sm:$0xff]
    %v1209 = vld [vmem:[%s6 + $0x100] sm:$0xff]
    %v1210 = vld [vmem:[%s6 + $0x108] sm:$0xff]
    %v1211 = vld [vmem:[%s6 + $0x110] sm:$0xff]
    %v1212 = vld [vmem:[%s6 + $0x118] sm:$0xff]
    %v1213 = vld [vmem:[%s6 + $0x120] sm:$0xff]
    %v1214 = vld [vmem:[%s6 + $0x128] sm:$0xff]
    %v1215 = vld [vmem:[%s6 + $0x130] sm:$0xff]
    %v1216 = vld [vmem:[%s6 + $0x138] sm:$0xff]
    %v1217 = vld [vmem:[%s6 + $0x140] sm:$0xff]
    %v1218 = vld [vmem:[%s6 + $0x148] sm:$0xff]
    %v1219 = vld [vmem:[%s6 + $0x150] sm:$0xff]
    %v1220 = vld [vmem:[%s6 + $0x158] sm:$0xff]
    %v1221 = vld [vmem:[%s6 + $0x160] sm:$0xff]
    %v1222 = vld [vmem:[%s6 + $0x168] sm:$0xff]
    %v1223 = vld [vmem:[%s6 + $0x170] sm:$0xff]
    %v1224 = vld [vmem:[%s6 + $0x178] sm:$0xff]
    %v1225 = vld [vmem:[%s6 + $0x180] sm:$0xff]
    %v1226 = vld [vmem:[%s6 + $0x188] sm:$0xff]
    %v1227 = vld [vmem:[%s6 + $0x190] sm:$0xff]
    %v1228 = vld [vmem:[%s6 + $0x198] sm:$0xff]
    %v1229 = vld [vmem:[%s6 + $0x1a0] sm:$0xff]
    %v1230 = vld [vmem:[%s6 + $0x1a8] sm:$0xff]
    %v1231 = vld [vmem:[%s6 + $0x1b0] sm:$0xff]
    %v1232 = vld [vmem:[%s6 + $0x1b8] sm:$0xff]
    %v1233 = vld [vmem:[%s6 + $0x1c0] sm:$0xff]
    %v1234 = vld [vmem:[%s6 + $0x1c8] sm:$0xff]
    %v1235 = vld [vmem:[%s6 + $0x1d0] sm:$0xff]
    %v1236 = vld [vmem:[%s6 + $0x1d8] sm:$0xff]
    %v1237 = vld [vmem:[%s6 + $0x1e0] sm:$0xff]
    %v1238 = vld [vmem:[%s6 + $0x1e8] sm:$0xff]
    %v1239 = vld [vmem:[%s6 + $0x1f0] sm:$0xff]
    %v1240 = vld [vmem:[%s6 + $0x1f8] sm:$0xff]
    %v1241 = vld [vmem:[%s6 + $0x200] sm:$0xff]
    %v1242 = vld [vmem:[%s6 + $0x208] sm:$0xff]
    %v1243 = vld [vmem:[%s6 + $0x210] sm:$0xff]
    %v1244 = vld [vmem:[%s6 + $0x218] sm:$0xff]
    %v1245 = vld [vmem:[%s6 + $0x220] sm:$0xff]
    %v1246 = vld [vmem:[%s6 + $0x228] sm:$0xff]
    %v1247 = vld [vmem:[%s6 + $0x230] sm:$0xff]
    %v1248 = vld [vmem:[%s6 + $0x238] sm:$0xff]
    %v1249 = vld [vmem:[%s6 + $0x240] sm:$0xff]
    %v1250 = vld [vmem:[%s6 + $0x248] sm:$0xff]
    %v1251 = vld [vmem:[%s6 + $0x250] sm:$0xff]
    %v1252 = vld [vmem:[%s6 + $0x258] sm:$0xff]
    %v1253 = vld [vmem:[%s6 + $0x260] sm:$0xff]
    %v1254 = vld [vmem:[%s6 + $0x268] sm:$0xff]
    %v1255 = vld [vmem:[%s6 + $0x270] sm:$0xff]
    %v1256 = vld [vmem:[%s6 + $0x278] sm:$0xff]
    %v1257 = vld [vmem:[%s6 + $0x280] sm:$0xff]
    %v1258 = vld [vmem:[%s6 + $0x288] sm:$0xff]
    %v1259 = vld [vmem:[%s6 + $0x290] sm:$0xff]
    %v1260 = vld [vmem:[%s6 + $0x298] sm:$0xff]
    %v1261 = vld [vmem:[%s6 + $0x2a0] sm:$0xff]
    %v1262 = vld [vmem:[%s6 + $0x2a8] sm:$0xff]
    %v1263 = vld [vmem:[%s6 + $0x2b0] sm:$0xff]
    %v1264 = vld [vmem:[%s6 + $0x2b8] sm:$0xff]
    %v1265 = vld [vmem:[%s6 + $0x2c0] sm:$0xff]
    %v1266 = vld [vmem:[%s6 + $0x2c8] sm:$0xff]
    %v1267 = vld [vmem:[%s6 + $0x2d0] sm:$0xff]
    %v1268 = vld [vmem:[%s6 + $0x2d8] sm:$0xff]
    %v1269 = vld [vmem:[%s6 + $0x2e0] sm:$0xff]
    %v1270 = vld [vmem:[%s6 + $0x2e8] sm:$0xff]
    %v1271 = vld [vmem:[%s6 + $0x2f0] sm:$0xff]
    %v1272 = vld [vmem:[%s6 + $0x2f8] sm:$0xff]
    %v1273 = vld [vmem:[%s6 + $0x300] sm:$0xff]
    %v1274 = vld [vmem:[%s6 + $0x308] sm:$0xff]
    %v1275 = vld [vmem:[%s6 + $0x310] sm:$0xff]
    %v1276 = vld [vmem:[%s6 + $0x318] sm:$0xff]
    %v1277 = vld [vmem:[%s6 + $0x320] sm:$0xff]
    %v1278 = vld [vmem:[%s6 + $0x328] sm:$0xff]
    %v1279 = vld [vmem:[%s6 + $0x330] sm:$0xff]
    %v1280 = vld [vmem:[%s6 + $0x338] sm:$0xff]
    %v1281 = vld [vmem:[%s6 + $0x340] sm:$0xff]
    %v1282 = vld [vmem:[%s6 + $0x348] sm:$0xff]
    %v1283 = vld [vmem:[%s6 + $0x350] sm:$0xff]
    %v1284 = vld [vmem:[%s6 + $0x358] sm:$0xff]
    %v1285 = vld [vmem:[%s6 + $0x360] sm:$0xff]
    %v1286 = vld [vmem:[%s6 + $0x368] sm:$0xff]
    %v1287 = vld [vmem:[%s6 + $0x370] sm:$0xff]
    %v1288 = vld [vmem:[%s6 + $0x378] sm:$0xff]
    %v1289 = vld [vmem:[%s6 + $0x380] sm:$0xff]
    %v1290 = vld [vmem:[%s6 + $0x388] sm:$0xff]
    %v1291 = vld [vmem:[%s6 + $0x390] sm:$0xff]
    %v1292 = vld [vmem:[%s6 + $0x398] sm:$0xff]
    %v1293 = vld [vmem:[%s6 + $0x3a0] sm:$0xff]
    %v1294 = vld [vmem:[%s6 + $0x3a8] sm:$0xff]
    %v1295 = vld [vmem:[%s6 + $0x3b0] sm:$0xff]
    %v1296 = vld [vmem:[%s6 + $0x3b8] sm:$0xff]
    %v1297 = vld [vmem:[%s6 + $0x3c0] sm:$0xff]
    %v1298 = vld [vmem:[%s6 + $0x3c8] sm:$0xff]
    %v1299 = vld [vmem:[%s6 + $0x3d0] sm:$0xff]
    %v1300 = vld [vmem:[%s6 + $0x3d8] sm:$0xff]
    %v1301 = vld [vmem:[%s6 + $0x3e0] sm:$0xff]
    %v1302 = vld [vmem:[%s6 + $0x3e8] sm:$0xff]
    %v1303 = vld [vmem:[%s6 + $0x3f0] sm:$0xff]
    %v1304 = vld [vmem:[%s6 + $0x3f8] sm:$0xff]
    %v1305 = vld [vmem:[#allocation10] sm:$0x1]
    %v1307 = vperm.slane %v1305, 0
    %1309 = vmatpush.msra.mxu0 %v1192
    %1310 = vmatpush.msra.mxu0 %v1191
    %1311 = vmatpush.msra.mxu0 %v1190
    %1312 = vmatpush.msra.mxu0 %v1189
    %1313 = vmatpush.msra.mxu0 %v1188
    %1314 = vmatpush.msra.mxu0 %v1187
    %1315 = vmatpush.msra.mxu0 %v1186
    %1316 = vmatpush.msra.mxu0 %v1185
    %1317 = vmatpush.msra.mxu0 %v1184
    %1318 = vmatpush.msra.mxu0 %v1183
    %1319 = vmatpush.msra.mxu0 %v1182
    %1320 = vmatpush.msra.mxu0 %v1181
    %1321 = vmatpush.msra.mxu0 %v1180
    %1322 = vmatpush.msra.mxu0 %v1179
    %1323 = vmatpush.msra.mxu0 %v1178
    %1324 = vmatpush.msra.mxu0 %v1177
    %1325 = vmatmul.f32.gmra.mxu0 %v1046
    %v1326 = vpop.f32.mrf.mxu0
    %v1327 = vadd.f32 %v1307, %v1326
    %1328 = vdwg.mxu0
    %1329 = vmatpush.msra.mxu0 %v1208
    %1330 = vmatpush.msra.mxu0 %v1207
    %1331 = vmatpush.msra.mxu0 %v1206
    %1332 = vmatpush.msra.mxu0 %v1205
    %1333 = vmatpush.msra.mxu0 %v1204
    %1334 = vmatpush.msra.mxu0 %v1203
    %1335 = vmatpush.msra.mxu0 %v1202
    %1336 = vmatpush.msra.mxu0 %v1201
    %1337 = vmatpush.msra.mxu0 %v1200
    %1338 = vmatpush.msra.mxu0 %v1199
    %1339 = vmatpush.msra.mxu0 %v1198
    %1340 = vmatpush.msra.mxu0 %v1197
    %1341 = vmatpush.msra.mxu0 %v1196
    %1342 = vmatpush.msra.mxu0 %v1195
    %1343 = vmatpush.msra.mxu0 %v1194
    %1344 = vmatpush.msra.mxu0 %v1193
    %1345 = vmatmul.f32.gmra.mxu0 %v1047
    %v1346 = vpop.f32.mrf.mxu0
    %v1347 = vadd.f32 %v1327, %v1346
    %1348 = vdwg.mxu0
    %1349 = vmatpush.msra.mxu0 %v1224
    %1350 = vmatpush.msra.mxu0 %v1223
    %1351 = vmatpush.msra.mxu0 %v1222
    %1352 = vmatpush.msra.mxu0 %v1221
    %1353 = vmatpush.msra.mxu0 %v1220
    %1354 = vmatpush.msra.mxu0 %v1219
    %1355 = vmatpush.msra.mxu0 %v1218
    %1356 = vmatpush.msra.mxu0 %v1217
    %1357 = vmatpush.msra.mxu0 %v1216
    %1358 = vmatpush.msra.mxu0 %v1215
    %1359 = vmatpush.msra.mxu0 %v1214
    %1360 = vmatpush.msra.mxu0 %v1213
    %1361 = vmatpush.msra.mxu0 %v1212
    %1362 = vmatpush.msra.mxu0 %v1211
    %1363 = vmatpush.msra.mxu0 %v1210
    %1364 = vmatpush.msra.mxu0 %v1209
    %1365 = vmatmul.f32.gmra.mxu0 %v1089
    %v1366 = vpop.f32.mrf.mxu0
    %v1367 = vadd.f32 %v1347, %v1366
    %1368 = vdwg.mxu0
    %1369 = vmatpush.msra.mxu0 %v1240
    %1370 = vmatpush.msra.mxu0 %v1239
    %1371 = vmatpush.msra.mxu0 %v1238
    %1372 = vmatpush.msra.mxu0 %v1237
    %1373 = vmatpush.msra.mxu0 %v1236
    %1374 = vmatpush.msra.mxu0 %v1235
    %1375 = vmatpush.msra.mxu0 %v1234
    %1376 = vmatpush.msra.mxu0 %v1233
    %1377 = vmatpush.msra.mxu0 %v1232
    %1378 = vmatpush.msra.mxu0 %v1231
    %1379 = vmatpush.msra.mxu0 %v1230
    %1380 = vmatpush.msra.mxu0 %v1229
    %1381 = vmatpush.msra.mxu0 %v1228
    %1382 = vmatpush.msra.mxu0 %v1227
    %1383 = vmatpush.msra.mxu0 %v1226
    %1384 = vmatpush.msra.mxu0 %v1225
    %1385 = vmatmul.f32.gmra.mxu0 %v1090
    %v1386 = vpop.f32.mrf.mxu0
    %v1387 = vadd.f32 %v1367, %v1386
    %1388 = vdwg.mxu0
    %1389 = vmatpush.msra.mxu0 %v1256
    %1390 = vmatpush.msra.mxu0 %v1255
    %1391 = vmatpush.msra.mxu0 %v1254
    %1392 = vmatpush.msra.mxu0 %v1253
    %1393 = vmatpush.msra.mxu0 %v1252
    %1394 = vmatpush.msra.mxu0 %v1251
    %1395 = vmatpush.msra.mxu0 %v1250
    %1396 = vmatpush.msra.mxu0 %v1249
    %1397 = vmatpush.msra.mxu0 %v1248
    %1398 = vmatpush.msra.mxu0 %v1247
    %1399 = vmatpush.msra.mxu0 %v1246
    %1400 = vmatpush.msra.mxu0 %v1245
    %1401 = vmatpush.msra.mxu0 %v1244
    %1402 = vmatpush.msra.mxu0 %v1243
    %1403 = vmatpush.msra.mxu0 %v1242
    %1404 = vmatpush.msra.mxu0 %v1241
    %1405 = vmatmul.f32.gmra.mxu0 %v1132
    %v1406 = vpop.f32.mrf.mxu0
    %v1407 = vadd.f32 %v1387, %v1406
    %1408 = vdwg.mxu0
    %1409 = vmatpush.msra.mxu0 %v1272
    %1410 = vmatpush.msra.mxu0 %v1271
    %1411 = vmatpush.msra.mxu0 %v1270
    %1412 = vmatpush.msra.mxu0 %v1269
    %1413 = vmatpush.msra.mxu0 %v1268
    %1414 = vmatpush.msra.mxu0 %v1267
    %1415 = vmatpush.msra.mxu0 %v1266
    %1416 = vmatpush.msra.mxu0 %v1265
    %1417 = vmatpush.msra.mxu0 %v1264
    %1418 = vmatpush.msra.mxu0 %v1263
    %1419 = vmatpush.msra.mxu0 %v1262
    %1420 = vmatpush.msra.mxu0 %v1261
    %1421 = vmatpush.msra.mxu0 %v1260
    %1422 = vmatpush.msra.mxu0 %v1259
    %1423 = vmatpush.msra.mxu0 %v1258
    %1424 = vmatpush.msra.mxu0 %v1257
    %1425 = vmatmul.f32.gmra.mxu0 %v1133
    %v1426 = vpop.f32.mrf.mxu0
    %v1427 = vadd.f32 %v1407, %v1426
    %1428 = vdwg.mxu0
    %1429 = vmatpush.msra.mxu0 %v1288
    %1430 = vmatpush.msra.mxu0 %v1287
    %1431 = vmatpush.msra.mxu0 %v1286
    %1432 = vmatpush.msra.mxu0 %v1285
    %1433 = vmatpush.msra.mxu0 %v1284
    %1434 = vmatpush.msra.mxu0 %v1283
    %1435 = vmatpush.msra.mxu0 %v1282
    %1436 = vmatpush.msra.mxu0 %v1281
    %1437 = vmatpush.msra.mxu0 %v1280
    %1438 = vmatpush.msra.mxu0 %v1279
    %1439 = vmatpush.msra.mxu0 %v1278
    %1440 = vmatpush.msra.mxu0 %v1277
    %1441 = vmatpush.msra.mxu0 %v1276
    %1442 = vmatpush.msra.mxu0 %v1275
    %1443 = vmatpush.msra.mxu0 %v1274
    %1444 = vmatpush.msra.mxu0 %v1273
    %1445 = vmatmul.f32.gmra.mxu0 %v1175
    %v1446 = vpop.f32.mrf.mxu0
    %v1447 = vadd.f32 %v1427, %v1446
    %1448 = vdwg.mxu0
    %1449 = vmatpush.msra.mxu0 %v1304
    %1450 = vmatpush.msra.mxu0 %v1303
    %1451 = vmatpush.msra.mxu0 %v1302
    %1452 = vmatpush.msra.mxu0 %v1301
    %1453 = vmatpush.msra.mxu0 %v1300
    %1454 = vmatpush.msra.mxu0 %v1299
    %1455 = vmatpush.msra.mxu0 %v1298
    %1456 = vmatpush.msra.mxu0 %v1297
    %1457 = vmatpush.msra.mxu0 %v1296
    %1458 = vmatpush.msra.mxu0 %v1295
    %1459 = vmatpush.msra.mxu0 %v1294
    %1460 = vmatpush.msra.mxu0 %v1293
    %1461 = vmatpush.msra.mxu0 %v1292
    %1462 = vmatpush.msra.mxu0 %v1291
    %1463 = vmatpush.msra.mxu0 %v1290
    %1464 = vmatpush.msra.mxu0 %v1289
    %1465 = vmatmul.f32.gmra.mxu0 %v1176
    %v1466 = vpop.f32.mrf.mxu0
    %v1467 = vadd.f32 %v1447, %v1466
    %1468 = vdwg.mxu0
    %v1469 = vxor.u32 %v1467, 2147483648
    %v1470 = vmul.f32 %v1469, 1.442695
    %v1471 = vpow.pop %v1470
    %v1472 = vadd.f32 %v1471, 1.0
    %v1473 = vrcp.pop %v1472
    %v1474 = vmul.f32 %v1472, %v1473
    %v1475 = vsub.f32 1.0, %v1474
    %v1476 = vmul.f32 %v1473, %v1475
    %v1477 = vadd.f32 %v1473, %v1476
    %vm1478 = vweird.f32 %v1472
    %vm1479 = vweird.f32 %v1473
    %vm1480 = vmor %vm1478, %vm1479
    %v1481 = vsel %vm1480, %v1473, %v1477
    %v1482 = vand.u32 2147483647, %v1472
    %vm1483 = vcmp.eq.f32.partialorder %v1482, 8.507059e+37
    %v1484 = vand.u32 %v1472, 2147483648
    %v1485 = vor.u32 1.1754944e-38, %v1484
    %v1486 = vsel %vm1483, %v1485, %v1481
    %v1487 = vmul.f32 1.0, %v1486
    %v1488 = vld [vmem:[%s1] sm:$0xff]
    %v1489 = vmul.f32 %v1488, %v1487
    %vm1490 = vcmask 31744
    %v1491 = vsel %vm1490, %v1489, 0.0
    %1492 = vadd.xlane.f32.xlu0 %v1491
    %v1493 = vpop.xlane.xlu0 %1492
    %vm1494 = vcmask 7168
    %1495 = vst.msk [vmem:[%s8] sm:$0xff] %vm1494, %v1493
    // Predicated region
    $region58: #{tpu_custom_call.1} parent=1 // pred_check
      _
    $region59: #{tpu_custom_call.1} parent=1 // pred_check_branch
      %1497 = sbr.rel (0) target = $region61
    $region60: #{tpu_custom_call.1} parent=1 // pred_region
      _
    $region61: #{tpu_custom_call.1} parent=1 // pred_fallthru
      _
    // Predicated region
    $region62: #{tpu_custom_call.1} parent=1 // pred_check
      _
    $region63: #{tpu_custom_call.1} parent=1 // pred_check_branch
      %1499 = sbr.rel (0) target = $region65
    $region64: #{tpu_custom_call.1} parent=1 // pred_region
      _
    $region65: #{tpu_custom_call.1} parent=1 // pred_fallthru
      _
    %1500 = vsyncpa [#allocation3], 1
    %1501 = vsyncpa [#allocation5], 1
    %1502 = vsyncpa [#allocation8], 1
    %1503 = vsyncpa [#allocation11], 1

</llo_original>
